<compile_context>
chip_gen: v7x
topology: tpu7x:2x2x1
jax: 0.10.0
libtpu: 0.0.40
codegen_flags: <defaults>
</compile_context>

<pallas_src>
import functools
import math

import jax
import jax.numpy as jnp
import numpy as np
from jax import lax
from jax.experimental import pallas as pl
from jax.experimental.pallas import tpu as pltpu


def _rup(x, m):
    return -(-x // m) * m


# ----------------------------------------------------------------------------
# Weight-slab layout (shared between packer, wrapper and kernel)
# ----------------------------------------------------------------------------
def _layout(D, H, A):
    DP = _rup(max(D, 8), 8)          # padded encoder input rows
    GP = _rup(6 * H, 128)            # interleaved bi-GRU gate width (padded)
    QP = _rup(3 * A, 128)            # q/k/v (and GRUCell gate) width (padded)
    wbig_w = 2 * GP + QP             # [self-gates | neigh-gates | qkv]
    r_wbig = DP
    r_whc = DP + H
    r_vec = r_whc + max(2 * H, 2 * A)
    rows = _rup(r_vec + 8, 8)
    width = _rup(max(wbig_w, GP + 2 * QP), 128)
    return dict(DP=DP, gp=GP, qp=QP, wbig_w=wbig_w,
                r_wbig=r_wbig, r_whc=r_whc, r_vec=r_vec,
                rows=rows, width=width)


def _ileave(wf, wb, H):
    """(rows,3H)+(rows,3H) in [r|z|n] order -> (rows,6H) [rf rb zf zb nf nb]."""
    rows = wf.shape[0]
    out = np.zeros((rows, 6 * H), np.float32)
    for g in range(3):
        out[:, (2 * g) * H:(2 * g + 1) * H] = wf[:, g * H:(g + 1) * H]
        out[:, (2 * g + 1) * H:(2 * g + 2) * H] = wb[:, g * H:(g + 1) * H]
    return out


# ----------------------------------------------------------------------------
# The fused kernel: full GAT_Net forward for one group of threads.
# ----------------------------------------------------------------------------
def _gat_fused_kernel(obs_ref, hid_ref, gd_ref, sel_ref, w_ref, out_ref,
                      *, V, H, A, D, Bp):
    T = V - 1
    L = _layout(D, H, A)
    DP, GP, QP = L["DP"], L["gp"], L["qp"]
    WBIGW = L["wbig_w"]
    scale = 1.0 / math.sqrt(A)
    inv_tau = 100.0                                   # gumbel_softmax tau = 0.01

    # ---- weights: one slab, sliced into tile-aligned views -----------------
    enc_w = w_ref[0:DP, 0:H]                          # (DP, H)
    w_big = w_ref[L["r_wbig"]:L["r_wbig"] + H, 0:WBIGW]          # (H, 640)
    w_h = w_ref[L["r_whc"]:L["r_whc"] + 2 * H, 0:GP]             # (2H, 256)
    w_cell = w_ref[L["r_whc"]:L["r_whc"] + 2 * A, GP:GP + 2 * QP]  # (2A, 256)
    vecs = w_ref[L["r_vec"]:L["r_vec"] + 8, 0:L["width"]]        # bias rows
    enc_b = vecs[0:1, 0:H]
    b_big = vecs[1:2, 0:WBIGW]
    b_h = vecs[2:3, 0:GP]
    wd = vecs[3:4, 0:2 * H]                           # hard-logit diff [fwd|bwd]
    b_cell = vecs[4:5, 0:2 * QP]

    sel = sel_ref[...]                                # (T*Bp, Bp) 0/1 selector
    gd = gd_ref[...]                                  # (Bp, T) gumbel + bias diff

    # ---- 1. encoder: h2 = relu(obs @ W + b) --------------------------------
    h2 = jnp.maximum(
        jnp.dot(obs_ref[...], enc_w, preferred_element_type=jnp.float32)
        + enc_b, 0.0)                                 # (Bp, H)

    # ---- 2. ONE fused matmul for every h2 consumer -------------------------
    big = jnp.dot(h2, w_big, preferred_element_type=jnp.float32) + b_big
    pre_self = big[:, 0:GP]                           # self gates (+ b_ih), both dirs
    pre_neigh = big[:, GP:2 * GP]                     # neighbour-gate projection
    qkv = big[:, 2 * GP:2 * GP + QP]                  # fused q / k / v

    # neighbour-input gates for every time step (fwd & bwd share h_neigh(t))
    gi_neigh = jnp.dot(sel, pre_neigh, preferred_element_type=jnp.float32)

    # lane mask: True on forward-direction gate lanes of the interleaved layout
    lane = lax.broadcasted_iota(jnp.int32, (Bp, GP), 1)
    fwd_cols = (lane % (2 * H)) < H

    # ---- 3. fused bi-GRU: fwd step s & bwd step T-1-s in ONE hidden matmul --
    h_cat = jnp.zeros((Bp, 2 * H), jnp.float32)       # [hf | hb]
    h_hist = []
    for s in range(T):
        nf = gi_neigh[s * Bp:(s + 1) * Bp, :]
        nb = gi_neigh[(T - 1 - s) * Bp:(T - s) * Bp, :]
        gi = pre_self + jnp.where(fwd_cols, nf, nb)
        gh = jnp.dot(h_cat, w_h, preferred_element_type=jnp.float32) + b_h
        r = jax.nn.sigmoid(gi[:, 0:2 * H] + gh[:, 0:2 * H])
        z = jax.nn.sigmoid(gi[:, 2 * H:4 * H] + gh[:, 2 * H:4 * H])
        n = jnp.tanh(gi[:, 4 * H:6 * H] + r * gh[:, 4 * H:6 * H])
        h_cat = (1.0 - z) * n + z * h_cat
        h_hist.append(h_cat)

    # ---- 4. hard gates (off the serial chain) + attention mask -------------
    gate_mat = jnp.zeros((Bp, Bp), jnp.float32)
    allowed = jnp.zeros((Bp, Bp), jnp.float32)
    for t in range(T):
        hf_t = h_hist[t][:, 0:H]                      # fwd state at time t
        hb_t = h_hist[T - 1 - t][:, H:2 * H]          # bwd state at time t
        dlog = (jnp.sum(hf_t * wd[:, 0:H], axis=1, keepdims=True)
                + jnp.sum(hb_t * wd[:, H:2 * H], axis=1, keepdims=True))
        # 2-class gumbel softmax [:,1] == sigmoid((dlogit + dgumbel) / tau)
        gate_t = jax.nn.sigmoid((dlog + gd[:, t:t + 1]) * inv_tau)
        sel_t = sel[t * Bp:(t + 1) * Bp, :]
        gate_mat = gate_mat + gate_t * sel_t
        allowed = allowed + sel_t

    # ---- 5. masked soft attention, gated by the hard weights ---------------
    q = qkv[:, 0:A]
    k = qkv[:, A:2 * A]
    v = jnp.maximum(qkv[:, 2 * A:3 * A], 0.0)
    s_att = lax.dot_general(q, k, (((1,), (1,)), ((), ())),
                            preferred_element_type=jnp.float32) * scale
    s_att = s_att + (allowed - 1.0) * 1e30            # 0 allowed / -1e30 masked
    m = jnp.max(s_att, axis=-1, keepdims=True)
    e = jnp.exp(s_att - m)
    soft = e * pl.reciprocal(jnp.sum(e, axis=-1, keepdims=True), approx=True)
    x = jnp.dot(soft * gate_mat, v, preferred_element_type=jnp.float32)

    # ---- 6. output GRUCell (one block-diagonal matmul) ----------------------
    hprev = hid_ref[...]
    g = (jnp.dot(jnp.concatenate([x, hprev], axis=1), w_cell,
                 preferred_element_type=jnp.float32) + b_cell)
    gi_c = g[:, 0:QP]
    gh_c = g[:, QP:2 * QP]
    r = jax.nn.sigmoid(gi_c[:, 0:A] + gh_c[:, 0:A])
    z = jax.nn.sigmoid(gi_c[:, A:2 * A] + gh_c[:, A:2 * A])
    n = jnp.tanh(gi_c[:, 2 * A:3 * A] + r * gh_c[:, 2 * A:3 * A])
    h_new = (1.0 - z) * n + z * hprev
    out_ref[...] = h_new.astype(out_ref.dtype)        # full padded block store


# ----------------------------------------------------------------------------
# Constant neighbour-selector matrix (numpy, built once per shape)
# ----------------------------------------------------------------------------
def _build_sel(n_threads, V, Bp):
    T = V - 1
    sel = np.zeros((T * Bp, Bp), np.float32)
    for n in range(n_threads):
        for i in range(V):
            b = n * V + i
            m = 0
            for j in range(V):
                if j != i:
                    sel[m * Bp + b, n * V + j] = 1.0
                    m += 1
    return sel


# ----------------------------------------------------------------------------
# Pack every parameter into one f32 slab (single weight DMA)
# ----------------------------------------------------------------------------
def prepare_fused_params(p, D, H, A):
    L = _layout(D, H, A)
    GP, QP = L["gp"], L["qp"]
    get = lambda name: np.asarray(p[name], np.float32)
    slab = np.zeros((L["rows"], L["width"]), np.float32)

    # encoder
    slab[0:D, 0:H] = get("enc_w")
    slab[L["r_vec"] + 0, 0:H] = get("enc_b")

    # fused h2-consumer matmul: [self-gates | neighbour-gates | qkv]
    wif, wib = get("gru_wif"), get("gru_wib")              # (2H, 3H) each
    big = np.zeros((H, L["wbig_w"]), np.float32)
    big[:, 0:6 * H] = _ileave(wif[:H], wib[:H], H)
    big[:, GP:GP + 6 * H] = _ileave(wif[H:], wib[H:], H)
    big[:, 2 * GP + 0 * A:2 * GP + 1 * A] = get("wq")
    big[:, 2 * GP + 1 * A:2 * GP + 2 * A] = get("wk")
    big[:, 2 * GP + 2 * A:2 * GP + 3 * A] = get("wv")
    slab[L["r_wbig"]:L["r_wbig"] + H, 0:L["wbig_w"]] = big

    bbig = np.zeros((L["wbig_w"],), np.float32)
    bbig[0:6 * H] = _ileave(get("gru_bif")[None], get("gru_bib")[None], H)[0]
    bbig[2 * GP + 2 * A:2 * GP + 3 * A] = get("bv")
    slab[L["r_vec"] + 1, 0:L["wbig_w"]] = bbig

    # block-diagonal hidden-to-hidden weight for the combined [hf|hb] state
    whf, whb = get("gru_whf"), get("gru_whb")              # (H, 3H)
    wh = np.zeros((2 * H, GP), np.float32)
    for g in range(3):
        wh[0:H, (2 * g) * H:(2 * g + 1) * H] = whf[:, g * H:(g + 1) * H]
        wh[H:2 * H, (2 * g + 1) * H:(2 * g + 2) * H] = whb[:, g * H:(g + 1) * H]
    slab[L["r_whc"]:L["r_whc"] + 2 * H, 0:GP] = wh
    slab[L["r_vec"] + 2, 0:6 * H] = _ileave(get("gru_bhf")[None],
                                            get("gru_bhb")[None], H)[0]

    # hard-logit head folded to a single weight-difference row
    hw, hb = get("hard_w"), get("hard_b")
    slab[L["r_vec"] + 3, 0:2 * H] = hw[:, 1] - hw[:, 0]
    bdiff = float(hb[1] - hb[0])

    # output GRUCell: block-diagonal [x | h_prev] projection
    cell = np.zeros((2 * A, 2 * QP), np.float32)
    cell[0:A, 0:3 * A] = get("cell_wi")
    cell[A:2 * A, QP:QP + 3 * A] = get("cell_wh")
    slab[L["r_whc"]:L["r_whc"] + 2 * A, GP:GP + 2 * QP] = cell
    bcell = np.zeros((2 * QP,), np.float32)
    bcell[0:3 * A] = get("cell_bi")
    bcell[QP:QP + 3 * A] = get("cell_bh")
    slab[L["r_vec"] + 4, 0:2 * QP] = bcell

    return jnp.asarray(slab), jnp.float32(bdiff)


# ----------------------------------------------------------------------------
# Forward pass wrapper (single pallas_call, optional parallel grid over groups)
# ----------------------------------------------------------------------------
def gat_net_forward(slab, bdiff, obs, hidden_state, gumbel_key,
                    *, V, H, A, threads_per_group=None):
    N, V_, D = obs.shape
    assert V_ == V
    B = N * V
    T = V - 1
    L = _layout(D, H, A)
    DP = L["DP"]

    tpg = N if threads_per_group is None else max(1, min(threads_per_group, N))
    G = -(-N // tpg)                                  # grid size (thread groups)
    Np = G * tpg
    rows_g = tpg * V
    Bpg = _rup(rows_g, 8)

    obs_p = jnp.zeros((G, Bpg, DP), jnp.float32)
    obs_p = obs_p.at[:, :rows_g, :D].set(
        jnp.zeros((Np, V, D), jnp.float32).at[:N].set(obs).reshape(G, rows_g, D))
    obs_p = obs_p.reshape(G * Bpg, DP)

    hid_p = jnp.zeros((G, Bpg, A), jnp.float32)
    hid_p = hid_p.at[:, :rows_g, :].set(
        jnp.zeros((Np * V, A), jnp.float32).at[:B].set(hidden_state)
        .reshape(G, rows_g, A))
    hid_p = hid_p.reshape(G * Bpg, A)

    # TODO(synk): gumbel noise uses a deterministic JAX PRNG key instead of
    # torch's global RNG, so gates are not bit-identical to the PyTorch ref.
    u = jax.random.uniform(gumbel_key, (G * Bpg, T, 2), jnp.float32, 1e-10, 1.0)
    g = -jnp.log(-jnp.log(u))
    gd = (g[..., 1] - g[..., 0]) + bdiff              # (G*Bpg, T)

    sel = jnp.asarray(_build_sel(tpg, V, Bpg))        # shared by every group

    kernel = functools.partial(_gat_fused_kernel, V=V, H=H, A=A, D=D, Bp=Bpg)
    out = pl.pallas_call(
        kernel,
        out_shape=jax.ShapeDtypeStruct((G * Bpg, A), jnp.float32),
        grid=(G,),
        in_specs=[
            pl.BlockSpec((Bpg, DP), lambda gi: (gi, 0)),      # obs
            pl.BlockSpec((Bpg, A), lambda gi: (gi, 0)),       # hidden state
            pl.BlockSpec((Bpg, T), lambda gi: (gi, 0)),       # gumbel diff
            pl.BlockSpec((T * Bpg, Bpg), lambda gi: (0, 0)),  # selector (resident)
            pl.BlockSpec(slab.shape, lambda gi: (0, 0)),      # weight slab (resident)
        ],
        out_specs=pl.BlockSpec((Bpg, A), lambda gi: (gi, 0)),
        compiler_params=pltpu.CompilerParams(dimension_semantics=("parallel",)),
    )(obs_p, hid_p, gd, sel, slab)

    out = out.reshape(G, Bpg, A)[:, :rows_g].reshape(Np, V, A)[:N]
    return out.reshape(B, A)


gat_net_forward_jit = jax.jit(
    gat_net_forward, static_argnames=("V", "H", "A", "threads_per_group"))


# ----------------------------------------------------------------------------
# Deterministic parameter init (PyTorch-style uniform bounds)
# ----------------------------------------------------------------------------
def init_params(key, input_size, H, A):
    ks = jax.random.split(key, 24)
    u = lambda k, shape, bound: jax.random.uniform(k, shape, jnp.float32, -bound, bound)
    b_enc = 1.0 / math.sqrt(input_size)
    b_h = 1.0 / math.sqrt(H)
    b_2h = 1.0 / math.sqrt(2 * H)
    b_a = 1.0 / math.sqrt(A)
    return {
        "enc_w": u(ks[0], (input_size, H), b_enc), "enc_b": u(ks[1], (H,), b_enc),
        "gru_wif": u(ks[2], (2 * H, 3 * H), b_h), "gru_whf": u(ks[3], (H, 3 * H), b_h),
        "gru_bif": u(ks[4], (3 * H,), b_h), "gru_bhf": u(ks[5], (3 * H,), b_h),
        "gru_wib": u(ks[6], (2 * H, 3 * H), b_h), "gru_whb": u(ks[7], (H, 3 * H), b_h),
        "gru_bib": u(ks[8], (3 * H,), b_h), "gru_bhb": u(ks[9], (3 * H,), b_h),
        "hard_w": u(ks[10], (2 * H, 2), b_2h), "hard_b": u(ks[11], (2,), b_2h),
        "wq": u(ks[12], (H, A), b_h), "wk": u(ks[13], (H, A), b_h),
        "wv": u(ks[14], (H, A), b_h), "bv": u(ks[15], (A,), b_h),
        "cell_wi": u(ks[16], (A, 3 * A), b_a), "cell_wh": u(ks[17], (A, 3 * A), b_a),
        "cell_bi": u(ks[18], (3 * A,), b_a), "cell_bh": u(ks[19], (3 * A,), b_a),
    }


if __name__ == "__main__":
    N_THREAD = 4
    MAX_VEHICLE_NUM = 6
    INPUT_SIZE = 10
    GAT_HIDDEN_DIM = 32
    ATTENTION_DIM = 32

    root = jax.random.PRNGKey(0)
    k_param, k_obs, k_hid, k_gumbel = jax.random.split(root, 4)

    params = init_params(k_param, INPUT_SIZE, GAT_HIDDEN_DIM, ATTENTION_DIM)
    slab, bdiff = prepare_fused_params(params, INPUT_SIZE, GAT_HIDDEN_DIM, ATTENTION_DIM)

    obs = jax.random.normal(k_obs, (N_THREAD, MAX_VEHICLE_NUM, INPUT_SIZE), jnp.float32)
    hidden_state = jax.random.normal(
        k_hid, (N_THREAD * MAX_VEHICLE_NUM, ATTENTION_DIM), jnp.float32)

    out = gat_net_forward_jit(slab, bdiff, obs, hidden_state, k_gumbel,
                              V=MAX_VEHICLE_NUM, H=GAT_HIDDEN_DIM, A=ATTENTION_DIM,
                              threads_per_group=2)   # grid=(2,) "parallel" groups
    out = jax.block_until_ready(out)

    assert out.shape == (N_THREAD * MAX_VEHICLE_NUM, ATTENTION_DIM)
    assert bool(jnp.all(jnp.isfinite(out)))
    print("KERNEL_OK")
</pallas_src>

<mosaic_0001>
module attributes {stable_mosaic.version = 11 : i64} {
  func.func @_gat_fused_kernel(%arg0: i32, %arg1: memref<16x16xf32, #tpu.memory_space<vmem>>, %arg2: memref<16x32xf32, #tpu.memory_space<vmem>>, %arg3: memref<16x5xf32, #tpu.memory_space<vmem>>, %arg4: memref<80x16xf32, #tpu.memory_space<vmem>>, %arg5: memref<120x640xf32, #tpu.memory_space<vmem>>, %arg6: memref<16x32xf32, #tpu.memory_space<vmem>>) attributes {dimension_semantics = [#tpu.dimension_semantics<parallel>], iteration_bounds = array<i64: 2>, scalar_prefetch = 0 : i64, scratch_operands = 0 : i64, tpu.core_type = #tpu.core_type<tc>, window_params = [{transform_indices = @transform_0, window_bounds = array<i64: 16, 16>}, {transform_indices = @transform_1, window_bounds = array<i64: 16, 32>}, {transform_indices = @transform_2, window_bounds = array<i64: 16, 5>}, {pipeline_mode = #tpu.pipeline_mode<synchronous>, transform_indices = @transform_3, window_bounds = array<i64: 80, 16>}, {pipeline_mode = #tpu.pipeline_mode<synchronous>, transform_indices = @transform_4, window_bounds = array<i64: 120, 640>}, {transform_indices = @transform_5, window_bounds = array<i64: 16, 32>}]} {
    %c0 = arith.constant 0 : index
    %c0_0 = arith.constant 0 : index
    %0 = vector.load %arg5[%c0, %c0_0] : memref<120x640xf32, #tpu.memory_space<vmem>>, vector<16x32xf32>
    %c16 = arith.constant 16 : index
    %c0_1 = arith.constant 0 : index
    %1 = vector.load %arg5[%c16, %c0_1] : memref<120x640xf32, #tpu.memory_space<vmem>>, vector<32x640xf32>
    %c48 = arith.constant 48 : index
    %c0_2 = arith.constant 0 : index
    %2 = vector.load %arg5[%c48, %c0_2] : memref<120x640xf32, #tpu.memory_space<vmem>>, vector<64x256xf32>
    %c48_3 = arith.constant 48 : index
    %c256 = arith.constant 256 : index
    %3 = vector.load %arg5[%c48_3, %c256] : memref<120x640xf32, #tpu.memory_space<vmem>>, vector<64x256xf32>
    %c112 = arith.constant 112 : index
    %c0_4 = arith.constant 0 : index
    %4 = vector.load %arg5[%c112, %c0_4] : memref<120x640xf32, #tpu.memory_space<vmem>>, vector<8x640xf32>
    %5 = vector.extract_strided_slice %4 {offsets = [0, 0], sizes = [1, 32], strides = [1, 1]} : vector<8x640xf32> to vector<1x32xf32>
    %6 = vector.extract_strided_slice %4 {offsets = [1, 0], sizes = [1, 640], strides = [1, 1]} : vector<8x640xf32> to vector<1x640xf32>
    %7 = vector.extract_strided_slice %4 {offsets = [2, 0], sizes = [1, 256], strides = [1, 1]} : vector<8x640xf32> to vector<1x256xf32>
    %8 = vector.extract_strided_slice %4 {offsets = [3, 0], sizes = [1, 64], strides = [1, 1]} : vector<8x640xf32> to vector<1x64xf32>
    %9 = vector.extract_strided_slice %4 {offsets = [4, 0], sizes = [1, 256], strides = [1, 1]} : vector<8x640xf32> to vector<1x256xf32>
    %c0_5 = arith.constant 0 : index
    %c0_6 = arith.constant 0 : index
    %10 = vector.load %arg4[%c0_5, %c0_6] : memref<80x16xf32, #tpu.memory_space<vmem>>, vector<80x16xf32>
    %c0_7 = arith.constant 0 : index
    %c0_8 = arith.constant 0 : index
    %11 = vector.load %arg3[%c0_7, %c0_8] : memref<16x5xf32, #tpu.memory_space<vmem>>, vector<16x5xf32>
    %c0_9 = arith.constant 0 : index
    %c0_10 = arith.constant 0 : index
    %12 = vector.load %arg1[%c0_9, %c0_10] : memref<16x16xf32, #tpu.memory_space<vmem>>, vector<16x16xf32>
    %cst = arith.constant dense<0.000000e+00> : vector<16x32xf32>
    %13 = tpu.matmul %12, %0, %cst {dimension_numbers = #tpu.dot_dimension_numbers<[1], [0], [0], [1], [0, 0, 1, 1], [], []>} : vector<16x16xf32>, vector<16x32xf32>, vector<16x32xf32> -> vector<16x32xf32>
    %14 = vector.broadcast %5 : vector<1x32xf32> to vector<16x32xf32>
    %15 = arith.addf %13, %14 : vector<16x32xf32>
    %cst_11 = arith.constant 0.000000e+00 : f32
    %16 = vector.broadcast %cst_11 : f32 to vector<16x32xf32>
    %17 = arith.maximumf %15, %16 : vector<16x32xf32>
    %cst_12 = arith.constant dense<0.000000e+00> : vector<16x640xf32>
    %18 = tpu.matmul %17, %1, %cst_12 {dimension_numbers = #tpu.dot_dimension_numbers<[1], [0], [0], [1], [0, 0, 1, 1], [], []>} : vector<16x32xf32>, vector<32x640xf32>, vector<16x640xf32> -> vector<16x640xf32>
    %19 = vector.broadcast %6 : vector<1x640xf32> to vector<16x640xf32>
    %20 = arith.addf %18, %19 : vector<16x640xf32>
    %21 = vector.extract_strided_slice %20 {offsets = [0, 0], sizes = [16, 256], strides = [1, 1]} : vector<16x640xf32> to vector<16x256xf32>
    %22 = vector.extract_strided_slice %20 {offsets = [0, 256], sizes = [16, 256], strides = [1, 1]} : vector<16x640xf32> to vector<16x256xf32>
    %23 = vector.extract_strided_slice %20 {offsets = [0, 512], sizes = [16, 128], strides = [1, 1]} : vector<16x640xf32> to vector<16x128xf32>
    %cst_13 = arith.constant dense<0.000000e+00> : vector<80x256xf32>
    %24 = tpu.matmul %10, %22, %cst_13 {dimension_numbers = #tpu.dot_dimension_numbers<[1], [0], [0], [1], [0, 0, 1, 1], [], []>} : vector<80x16xf32>, vector<16x256xf32>, vector<80x256xf32> -> vector<80x256xf32>
    %25 = tpu.iota {dimensions = array<i32: 1>} : vector<16x256xi32>
    %c64_i32 = arith.constant 64 : i32
    %c0_i32 = arith.constant 0 : i32
    %26 = arith.cmpi eq, %c64_i32, %c0_i32 : i32
    %c1_i32 = arith.constant 1 : i32
    %27 = arith.select %26, %c1_i32, %c64_i32 : i32
    %28 = vector.broadcast %27 : i32 to vector<16x256xi32>
    %29 = arith.remsi %25, %28 : vector<16x256xi32>
    %c0_i32_14 = arith.constant 0 : i32
    %30 = vector.broadcast %c0_i32_14 : i32 to vector<16x256xi32>
    %31 = arith.cmpi ne, %29, %30 : vector<16x256xi32>
    %c0_i32_15 = arith.constant 0 : i32
    %32 = vector.broadcast %c0_i32_15 : i32 to vector<16x256xi32>
    %33 = arith.cmpi slt, %29, %32 : vector<16x256xi32>
    %c0_i32_16 = arith.constant 0 : i32
    %34 = arith.cmpi slt, %27, %c0_i32_16 : i32
    %35 = vector.broadcast %34 : i1 to vector<16x256xi1>
    %36 = vector.broadcast %35 : vector<16x256xi1> to vector<16x256xi1>
    %37 = arith.xori %33, %36 : vector<16x256xi1>
    %38 = arith.andi %37, %31 : vector<16x256xi1>
    %39 = vector.broadcast %27 : i32 to vector<16x256xi32>
    %40 = arith.addi %29, %39 : vector<16x256xi32>
    %41 = arith.select %38, %40, %29 : vector<16x256xi1>, vector<16x256xi32>
    %c32_i32 = arith.constant 32 : i32
    %42 = vector.broadcast %c32_i32 : i32 to vector<16x256xi32>
    %43 = arith.cmpi slt, %41, %42 : vector<16x256xi32>
    %cst_17 = arith.constant 0.000000e+00 : f32
    %44 = vector.broadcast %cst_17 : f32 to vector<16x64xf32>
    %45 = vector.extract_strided_slice %24 {offsets = [0, 0], sizes = [16, 256], strides = [1, 1]} : vector<80x256xf32> to vector<16x256xf32>
    %46 = vector.extract_strided_slice %24 {offsets = [64, 0], sizes = [16, 256], strides = [1, 1]} : vector<80x256xf32> to vector<16x256xf32>
    %47 = arith.select %43, %45, %46 : vector<16x256xi1>, vector<16x256xf32>
    %48 = arith.addf %21, %47 : vector<16x256xf32>
    %cst_18 = arith.constant dense<0.000000e+00> : vector<16x256xf32>
    %49 = tpu.matmul %44, %2, %cst_18 {dimension_numbers = #tpu.dot_dimension_numbers<[1], [0], [0], [1], [0, 0, 1, 1], [], []>} : vector<16x64xf32>, vector<64x256xf32>, vector<16x256xf32> -> vector<16x256xf32>
    %50 = vector.broadcast %7 : vector<1x256xf32> to vector<16x256xf32>
    %51 = arith.addf %49, %50 : vector<16x256xf32>
    %52 = vector.extract_strided_slice %48 {offsets = [0, 0], sizes = [16, 64], strides = [1, 1]} : vector<16x256xf32> to vector<16x64xf32>
    %53 = vector.extract_strided_slice %51 {offsets = [0, 0], sizes = [16, 64], strides = [1, 1]} : vector<16x256xf32> to vector<16x64xf32>
    %54 = arith.addf %52, %53 : vector<16x64xf32>
    %55 = arith.negf %54 : vector<16x64xf32>
    %56 = math.exp %55 : vector<16x64xf32>
    %cst_19 = arith.constant 1.000000e+00 : f32
    %57 = vector.broadcast %cst_19 : f32 to vector<16x64xf32>
    %58 = arith.addf %57, %56 : vector<16x64xf32>
    %59 = arith.divf %57, %58 : vector<16x64xf32>
    %60 = vector.extract_strided_slice %48 {offsets = [0, 64], sizes = [16, 64], strides = [1, 1]} : vector<16x256xf32> to vector<16x64xf32>
    %61 = vector.extract_strided_slice %51 {offsets = [0, 64], sizes = [16, 64], strides = [1, 1]} : vector<16x256xf32> to vector<16x64xf32>
    %62 = arith.addf %60, %61 : vector<16x64xf32>
    %63 = arith.negf %62 : vector<16x64xf32>
    %64 = math.exp %63 : vector<16x64xf32>
    %cst_20 = arith.constant 1.000000e+00 : f32
    %65 = vector.broadcast %cst_20 : f32 to vector<16x64xf32>
    %66 = arith.addf %65, %64 : vector<16x64xf32>
    %67 = arith.divf %65, %66 : vector<16x64xf32>
    %68 = vector.extract_strided_slice %48 {offsets = [0, 128], sizes = [16, 64], strides = [1, 1]} : vector<16x256xf32> to vector<16x64xf32>
    %69 = vector.extract_strided_slice %51 {offsets = [0, 128], sizes = [16, 64], strides = [1, 1]} : vector<16x256xf32> to vector<16x64xf32>
    %70 = arith.mulf %59, %69 : vector<16x64xf32>
    %71 = arith.addf %68, %70 : vector<16x64xf32>
    %72 = math.tanh %71 : vector<16x64xf32>
    %cst_21 = arith.constant 1.000000e+00 : f32
    %73 = vector.broadcast %cst_21 : f32 to vector<16x64xf32>
    %74 = arith.subf %73, %67 : vector<16x64xf32>
    %75 = arith.mulf %74, %72 : vector<16x64xf32>
    %76 = arith.mulf %67, %44 : vector<16x64xf32>
    %77 = arith.addf %75, %76 : vector<16x64xf32>
    %78 = vector.extract_strided_slice %24 {offsets = [16, 0], sizes = [16, 256], strides = [1, 1]} : vector<80x256xf32> to vector<16x256xf32>
    %79 = vector.extract_strided_slice %24 {offsets = [48, 0], sizes = [16, 256], strides = [1, 1]} : vector<80x256xf32> to vector<16x256xf32>
    %80 = arith.select %43, %78, %79 : vector<16x256xi1>, vector<16x256xf32>
    %81 = arith.addf %21, %80 : vector<16x256xf32>
    %cst_22 = arith.constant dense<0.000000e+00> : vector<16x256xf32>
    %82 = tpu.matmul %77, %2, %cst_22 {dimension_numbers = #tpu.dot_dimension_numbers<[1], [0], [0], [1], [0, 0, 1, 1], [], []>} : vector<16x64xf32>, vector<64x256xf32>, vector<16x256xf32> -> vector<16x256xf32>
    %83 = vector.broadcast %7 : vector<1x256xf32> to vector<16x256xf32>
    %84 = arith.addf %82, %83 : vector<16x256xf32>
    %85 = vector.extract_strided_slice %81 {offsets = [0, 0], sizes = [16, 64], strides = [1, 1]} : vector<16x256xf32> to vector<16x64xf32>
    %86 = vector.extract_strided_slice %84 {offsets = [0, 0], sizes = [16, 64], strides = [1, 1]} : vector<16x256xf32> to vector<16x64xf32>
    %87 = arith.addf %85, %86 : vector<16x64xf32>
    %88 = arith.negf %87 : vector<16x64xf32>
    %89 = math.exp %88 : vector<16x64xf32>
    %cst_23 = arith.constant 1.000000e+00 : f32
    %90 = vector.broadcast %cst_23 : f32 to vector<16x64xf32>
    %91 = arith.addf %90, %89 : vector<16x64xf32>
    %92 = arith.divf %90, %91 : vector<16x64xf32>
    %93 = vector.extract_strided_slice %81 {offsets = [0, 64], sizes = [16, 64], strides = [1, 1]} : vector<16x256xf32> to vector<16x64xf32>
    %94 = vector.extract_strided_slice %84 {offsets = [0, 64], sizes = [16, 64], strides = [1, 1]} : vector<16x256xf32> to vector<16x64xf32>
    %95 = arith.addf %93, %94 : vector<16x64xf32>
    %96 = arith.negf %95 : vector<16x64xf32>
    %97 = math.exp %96 : vector<16x64xf32>
    %cst_24 = arith.constant 1.000000e+00 : f32
    %98 = vector.broadcast %cst_24 : f32 to vector<16x64xf32>
    %99 = arith.addf %98, %97 : vector<16x64xf32>
    %100 = arith.divf %98, %99 : vector<16x64xf32>
    %101 = vector.extract_strided_slice %81 {offsets = [0, 128], sizes = [16, 64], strides = [1, 1]} : vector<16x256xf32> to vector<16x64xf32>
    %102 = vector.extract_strided_slice %84 {offsets = [0, 128], sizes = [16, 64], strides = [1, 1]} : vector<16x256xf32> to vector<16x64xf32>
    %103 = arith.mulf %92, %102 : vector<16x64xf32>
    %104 = arith.addf %101, %103 : vector<16x64xf32>
    %105 = math.tanh %104 : vector<16x64xf32>
    %cst_25 = arith.constant 1.000000e+00 : f32
    %106 = vector.broadcast %cst_25 : f32 to vector<16x64xf32>
    %107 = arith.subf %106, %100 : vector<16x64xf32>
    %108 = arith.mulf %107, %105 : vector<16x64xf32>
    %109 = arith.mulf %100, %77 : vector<16x64xf32>
    %110 = arith.addf %108, %109 : vector<16x64xf32>
    %111 = vector.extract_strided_slice %24 {offsets = [32, 0], sizes = [16, 256], strides = [1, 1]} : vector<80x256xf32> to vector<16x256xf32>
    %112 = vector.extract_strided_slice %24 {offsets = [32, 0], sizes = [16, 256], strides = [1, 1]} : vector<80x256xf32> to vector<16x256xf32>
    %113 = arith.select %43, %111, %112 : vector<16x256xi1>, vector<16x256xf32>
    %114 = arith.addf %21, %113 : vector<16x256xf32>
    %cst_26 = arith.constant dense<0.000000e+00> : vector<16x256xf32>
    %115 = tpu.matmul %110, %2, %cst_26 {dimension_numbers = #tpu.dot_dimension_numbers<[1], [0], [0], [1], [0, 0, 1, 1], [], []>} : vector<16x64xf32>, vector<64x256xf32>, vector<16x256xf32> -> vector<16x256xf32>
    %116 = vector.broadcast %7 : vector<1x256xf32> to vector<16x256xf32>
    %117 = arith.addf %115, %116 : vector<16x256xf32>
    %118 = vector.extract_strided_slice %114 {offsets = [0, 0], sizes = [16, 64], strides = [1, 1]} : vector<16x256xf32> to vector<16x64xf32>
    %119 = vector.extract_strided_slice %117 {offsets = [0, 0], sizes = [16, 64], strides = [1, 1]} : vector<16x256xf32> to vector<16x64xf32>
    %120 = arith.addf %118, %119 : vector<16x64xf32>
    %121 = arith.negf %120 : vector<16x64xf32>
    %122 = math.exp %121 : vector<16x64xf32>
    %cst_27 = arith.constant 1.000000e+00 : f32
    %123 = vector.broadcast %cst_27 : f32 to vector<16x64xf32>
    %124 = arith.addf %123, %122 : vector<16x64xf32>
    %125 = arith.divf %123, %124 : vector<16x64xf32>
    %126 = vector.extract_strided_slice %114 {offsets = [0, 64], sizes = [16, 64], strides = [1, 1]} : vector<16x256xf32> to vector<16x64xf32>
    %127 = vector.extract_strided_slice %117 {offsets = [0, 64], sizes = [16, 64], strides = [1, 1]} : vector<16x256xf32> to vector<16x64xf32>
    %128 = arith.addf %126, %127 : vector<16x64xf32>
    %129 = arith.negf %128 : vector<16x64xf32>
    %130 = math.exp %129 : vector<16x64xf32>
    %cst_28 = arith.constant 1.000000e+00 : f32
    %131 = vector.broadcast %cst_28 : f32 to vector<16x64xf32>
    %132 = arith.addf %131, %130 : vector<16x64xf32>
    %133 = arith.divf %131, %132 : vector<16x64xf32>
    %134 = vector.extract_strided_slice %114 {offsets = [0, 128], sizes = [16, 64], strides = [1, 1]} : vector<16x256xf32> to vector<16x64xf32>
    %135 = vector.extract_strided_slice %117 {offsets = [0, 128], sizes = [16, 64], strides = [1, 1]} : vector<16x256xf32> to vector<16x64xf32>
    %136 = arith.mulf %125, %135 : vector<16x64xf32>
    %137 = arith.addf %134, %136 : vector<16x64xf32>
    %138 = math.tanh %137 : vector<16x64xf32>
    %cst_29 = arith.constant 1.000000e+00 : f32
    %139 = vector.broadcast %cst_29 : f32 to vector<16x64xf32>
    %140 = arith.subf %139, %133 : vector<16x64xf32>
    %141 = arith.mulf %140, %138 : vector<16x64xf32>
    %142 = arith.mulf %133, %110 : vector<16x64xf32>
    %143 = arith.addf %141, %142 : vector<16x64xf32>
    %144 = vector.extract_strided_slice %24 {offsets = [48, 0], sizes = [16, 256], strides = [1, 1]} : vector<80x256xf32> to vector<16x256xf32>
    %145 = vector.extract_strided_slice %24 {offsets = [16, 0], sizes = [16, 256], strides = [1, 1]} : vector<80x256xf32> to vector<16x256xf32>
    %146 = arith.select %43, %144, %145 : vector<16x256xi1>, vector<16x256xf32>
    %147 = arith.addf %21, %146 : vector<16x256xf32>
    %cst_30 = arith.constant dense<0.000000e+00> : vector<16x256xf32>
    %148 = tpu.matmul %143, %2, %cst_30 {dimension_numbers = #tpu.dot_dimension_numbers<[1], [0], [0], [1], [0, 0, 1, 1], [], []>} : vector<16x64xf32>, vector<64x256xf32>, vector<16x256xf32> -> vector<16x256xf32>
    %149 = vector.broadcast %7 : vector<1x256xf32> to vector<16x256xf32>
    %150 = arith.addf %148, %149 : vector<16x256xf32>
    %151 = vector.extract_strided_slice %147 {offsets = [0, 0], sizes = [16, 64], strides = [1, 1]} : vector<16x256xf32> to vector<16x64xf32>
    %152 = vector.extract_strided_slice %150 {offsets = [0, 0], sizes = [16, 64], strides = [1, 1]} : vector<16x256xf32> to vector<16x64xf32>
    %153 = arith.addf %151, %152 : vector<16x64xf32>
    %154 = arith.negf %153 : vector<16x64xf32>
    %155 = math.exp %154 : vector<16x64xf32>
    %cst_31 = arith.constant 1.000000e+00 : f32
    %156 = vector.broadcast %cst_31 : f32 to vector<16x64xf32>
    %157 = arith.addf %156, %155 : vector<16x64xf32>
    %158 = arith.divf %156, %157 : vector<16x64xf32>
    %159 = vector.extract_strided_slice %147 {offsets = [0, 64], sizes = [16, 64], strides = [1, 1]} : vector<16x256xf32> to vector<16x64xf32>
    %160 = vector.extract_strided_slice %150 {offsets = [0, 64], sizes = [16, 64], strides = [1, 1]} : vector<16x256xf32> to vector<16x64xf32>
    %161 = arith.addf %159, %160 : vector<16x64xf32>
    %162 = arith.negf %161 : vector<16x64xf32>
    %163 = math.exp %162 : vector<16x64xf32>
    %cst_32 = arith.constant 1.000000e+00 : f32
    %164 = vector.broadcast %cst_32 : f32 to vector<16x64xf32>
    %165 = arith.addf %164, %163 : vector<16x64xf32>
    %166 = arith.divf %164, %165 : vector<16x64xf32>
    %167 = vector.extract_strided_slice %147 {offsets = [0, 128], sizes = [16, 64], strides = [1, 1]} : vector<16x256xf32> to vector<16x64xf32>
    %168 = vector.extract_strided_slice %150 {offsets = [0, 128], sizes = [16, 64], strides = [1, 1]} : vector<16x256xf32> to vector<16x64xf32>
    %169 = arith.mulf %158, %168 : vector<16x64xf32>
    %170 = arith.addf %167, %169 : vector<16x64xf32>
    %171 = math.tanh %170 : vector<16x64xf32>
    %cst_33 = arith.constant 1.000000e+00 : f32
    %172 = vector.broadcast %cst_33 : f32 to vector<16x64xf32>
    %173 = arith.subf %172, %166 : vector<16x64xf32>
    %174 = arith.mulf %173, %171 : vector<16x64xf32>
    %175 = arith.mulf %166, %143 : vector<16x64xf32>
    %176 = arith.addf %174, %175 : vector<16x64xf32>
    %177 = vector.extract_strided_slice %24 {offsets = [64, 0], sizes = [16, 256], strides = [1, 1]} : vector<80x256xf32> to vector<16x256xf32>
    %178 = vector.extract_strided_slice %24 {offsets = [0, 0], sizes = [16, 256], strides = [1, 1]} : vector<80x256xf32> to vector<16x256xf32>
    %179 = arith.select %43, %177, %178 : vector<16x256xi1>, vector<16x256xf32>
    %180 = arith.addf %21, %179 : vector<16x256xf32>
    %cst_34 = arith.constant dense<0.000000e+00> : vector<16x256xf32>
    %181 = tpu.matmul %176, %2, %cst_34 {dimension_numbers = #tpu.dot_dimension_numbers<[1], [0], [0], [1], [0, 0, 1, 1], [], []>} : vector<16x64xf32>, vector<64x256xf32>, vector<16x256xf32> -> vector<16x256xf32>
    %182 = vector.broadcast %7 : vector<1x256xf32> to vector<16x256xf32>
    %183 = arith.addf %181, %182 : vector<16x256xf32>
    %184 = vector.extract_strided_slice %180 {offsets = [0, 0], sizes = [16, 64], strides = [1, 1]} : vector<16x256xf32> to vector<16x64xf32>
    %185 = vector.extract_strided_slice %183 {offsets = [0, 0], sizes = [16, 64], strides = [1, 1]} : vector<16x256xf32> to vector<16x64xf32>
    %186 = arith.addf %184, %185 : vector<16x64xf32>
    %187 = arith.negf %186 : vector<16x64xf32>
    %188 = math.exp %187 : vector<16x64xf32>
    %cst_35 = arith.constant 1.000000e+00 : f32
    %189 = vector.broadcast %cst_35 : f32 to vector<16x64xf32>
    %190 = arith.addf %189, %188 : vector<16x64xf32>
    %191 = arith.divf %189, %190 : vector<16x64xf32>
    %192 = vector.extract_strided_slice %180 {offsets = [0, 64], sizes = [16, 64], strides = [1, 1]} : vector<16x256xf32> to vector<16x64xf32>
    %193 = vector.extract_strided_slice %183 {offsets = [0, 64], sizes = [16, 64], strides = [1, 1]} : vector<16x256xf32> to vector<16x64xf32>
    %194 = arith.addf %192, %193 : vector<16x64xf32>
    %195 = arith.negf %194 : vector<16x64xf32>
    %196 = math.exp %195 : vector<16x64xf32>
    %cst_36 = arith.constant 1.000000e+00 : f32
    %197 = vector.broadcast %cst_36 : f32 to vector<16x64xf32>
    %198 = arith.addf %197, %196 : vector<16x64xf32>
    %199 = arith.divf %197, %198 : vector<16x64xf32>
    %200 = vector.extract_strided_slice %180 {offsets = [0, 128], sizes = [16, 64], strides = [1, 1]} : vector<16x256xf32> to vector<16x64xf32>
    %201 = vector.extract_strided_slice %183 {offsets = [0, 128], sizes = [16, 64], strides = [1, 1]} : vector<16x256xf32> to vector<16x64xf32>
    %202 = arith.mulf %191, %201 : vector<16x64xf32>
    %203 = arith.addf %200, %202 : vector<16x64xf32>
    %204 = math.tanh %203 : vector<16x64xf32>
    %cst_37 = arith.constant 1.000000e+00 : f32
    %205 = vector.broadcast %cst_37 : f32 to vector<16x64xf32>
    %206 = arith.subf %205, %199 : vector<16x64xf32>
    %207 = arith.mulf %206, %204 : vector<16x64xf32>
    %208 = arith.mulf %199, %176 : vector<16x64xf32>
    %209 = arith.addf %207, %208 : vector<16x64xf32>
    %cst_38 = arith.constant 0.000000e+00 : f32
    %210 = vector.broadcast %cst_38 : f32 to vector<16x16xf32>
    %cst_39 = arith.constant 0.000000e+00 : f32
    %211 = vector.broadcast %cst_39 : f32 to vector<16x16xf32>
    %212 = vector.extract_strided_slice %77 {offsets = [0, 0], sizes = [16, 32], strides = [1, 1]} : vector<16x64xf32> to vector<16x32xf32>
    %213 = vector.extract_strided_slice %209 {offsets = [0, 32], sizes = [16, 32], strides = [1, 1]} : vector<16x64xf32> to vector<16x32xf32>
    %214 = vector.extract_strided_slice %8 {offsets = [0, 0], sizes = [1, 32], strides = [1, 1]} : vector<1x64xf32> to vector<1x32xf32>
    %215 = vector.broadcast %214 : vector<1x32xf32> to vector<16x32xf32>
    %216 = arith.mulf %212, %215 : vector<16x32xf32>
    %cst_40 = arith.constant dense<0.000000e+00> : vector<16xf32>
    %217 = vector.multi_reduction <add>, %216, %cst_40 [1] : vector<16x32xf32> to vector<16xf32>
    %218 = vector.shape_cast %217 : vector<16xf32> to vector<16x1xf32>
    %219 = vector.extract_strided_slice %8 {offsets = [0, 32], sizes = [1, 32], strides = [1, 1]} : vector<1x64xf32> to vector<1x32xf32>
    %220 = vector.broadcast %219 : vector<1x32xf32> to vector<16x32xf32>
    %221 = arith.mulf %213, %220 : vector<16x32xf32>
    %cst_41 = arith.constant dense<0.000000e+00> : vector<16xf32>
    %222 = vector.multi_reduction <add>, %221, %cst_41 [1] : vector<16x32xf32> to vector<16xf32>
    %223 = vector.shape_cast %222 : vector<16xf32> to vector<16x1xf32>
    %224 = arith.addf %218, %223 : vector<16x1xf32>
    %225 = vector.extract_strided_slice %11 {offsets = [0, 0], sizes = [16, 1], strides = [1, 1]} : vector<16x5xf32> to vector<16x1xf32>
    %226 = arith.addf %224, %225 : vector<16x1xf32>
    %cst_42 = arith.constant 1.000000e+02 : f32
    %227 = vector.broadcast %cst_42 : f32 to vector<16x1xf32>
    %228 = arith.mulf %226, %227 : vector<16x1xf32>
    %229 = arith.negf %228 : vector<16x1xf32>
    %230 = math.exp %229 : vector<16x1xf32>
    %cst_43 = arith.constant 1.000000e+00 : f32
    %231 = vector.broadcast %cst_43 : f32 to vector<16x1xf32>
    %232 = arith.addf %231, %230 : vector<16x1xf32>
    %233 = arith.divf %231, %232 : vector<16x1xf32>
    %234 = vector.extract_strided_slice %10 {offsets = [0, 0], sizes = [16, 16], strides = [1, 1]} : vector<80x16xf32> to vector<16x16xf32>
    %235 = vector.broadcast %233 : vector<16x1xf32> to vector<16x16xf32>
    %236 = arith.mulf %235, %234 : vector<16x16xf32>
    %237 = arith.addf %210, %236 : vector<16x16xf32>
    %238 = arith.addf %211, %234 : vector<16x16xf32>
    %239 = vector.extract_strided_slice %110 {offsets = [0, 0], sizes = [16, 32], strides = [1, 1]} : vector<16x64xf32> to vector<16x32xf32>
    %240 = vector.extract_strided_slice %176 {offsets = [0, 32], sizes = [16, 32], strides = [1, 1]} : vector<16x64xf32> to vector<16x32xf32>
    %241 = vector.extract_strided_slice %8 {offsets = [0, 0], sizes = [1, 32], strides = [1, 1]} : vector<1x64xf32> to vector<1x32xf32>
    %242 = vector.broadcast %241 : vector<1x32xf32> to vector<16x32xf32>
    %243 = arith.mulf %239, %242 : vector<16x32xf32>
    %cst_44 = arith.constant dense<0.000000e+00> : vector<16xf32>
    %244 = vector.multi_reduction <add>, %243, %cst_44 [1] : vector<16x32xf32> to vector<16xf32>
    %245 = vector.shape_cast %244 : vector<16xf32> to vector<16x1xf32>
    %246 = vector.extract_strided_slice %8 {offsets = [0, 32], sizes = [1, 32], strides = [1, 1]} : vector<1x64xf32> to vector<1x32xf32>
    %247 = vector.broadcast %246 : vector<1x32xf32> to vector<16x32xf32>
    %248 = arith.mulf %240, %247 : vector<16x32xf32>
    %cst_45 = arith.constant dense<0.000000e+00> : vector<16xf32>
    %249 = vector.multi_reduction <add>, %248, %cst_45 [1] : vector<16x32xf32> to vector<16xf32>
    %250 = vector.shape_cast %249 : vector<16xf32> to vector<16x1xf32>
    %251 = arith.addf %245, %250 : vector<16x1xf32>
    %252 = vector.extract_strided_slice %11 {offsets = [0, 1], sizes = [16, 1], strides = [1, 1]} : vector<16x5xf32> to vector<16x1xf32>
    %253 = arith.addf %251, %252 : vector<16x1xf32>
    %cst_46 = arith.constant 1.000000e+02 : f32
    %254 = vector.broadcast %cst_46 : f32 to vector<16x1xf32>
    %255 = arith.mulf %253, %254 : vector<16x1xf32>
    %256 = arith.negf %255 : vector<16x1xf32>
    %257 = math.exp %256 : vector<16x1xf32>
    %cst_47 = arith.constant 1.000000e+00 : f32
    %258 = vector.broadcast %cst_47 : f32 to vector<16x1xf32>
    %259 = arith.addf %258, %257 : vector<16x1xf32>
    %260 = arith.divf %258, %259 : vector<16x1xf32>
    %261 = vector.extract_strided_slice %10 {offsets = [16, 0], sizes = [16, 16], strides = [1, 1]} : vector<80x16xf32> to vector<16x16xf32>
    %262 = vector.broadcast %260 : vector<16x1xf32> to vector<16x16xf32>
    %263 = arith.mulf %262, %261 : vector<16x16xf32>
    %264 = arith.addf %237, %263 : vector<16x16xf32>
    %265 = arith.addf %238, %261 : vector<16x16xf32>
    %266 = vector.extract_strided_slice %143 {offsets = [0, 0], sizes = [16, 32], strides = [1, 1]} : vector<16x64xf32> to vector<16x32xf32>
    %267 = vector.extract_strided_slice %143 {offsets = [0, 32], sizes = [16, 32], strides = [1, 1]} : vector<16x64xf32> to vector<16x32xf32>
    %268 = vector.extract_strided_slice %8 {offsets = [0, 0], sizes = [1, 32], strides = [1, 1]} : vector<1x64xf32> to vector<1x32xf32>
    %269 = vector.broadcast %268 : vector<1x32xf32> to vector<16x32xf32>
    %270 = arith.mulf %266, %269 : vector<16x32xf32>
    %cst_48 = arith.constant dense<0.000000e+00> : vector<16xf32>
    %271 = vector.multi_reduction <add>, %270, %cst_48 [1] : vector<16x32xf32> to vector<16xf32>
    %272 = vector.shape_cast %271 : vector<16xf32> to vector<16x1xf32>
    %273 = vector.extract_strided_slice %8 {offsets = [0, 32], sizes = [1, 32], strides = [1, 1]} : vector<1x64xf32> to vector<1x32xf32>
    %274 = vector.broadcast %273 : vector<1x32xf32> to vector<16x32xf32>
    %275 = arith.mulf %267, %274 : vector<16x32xf32>
    %cst_49 = arith.constant dense<0.000000e+00> : vector<16xf32>
    %276 = vector.multi_reduction <add>, %275, %cst_49 [1] : vector<16x32xf32> to vector<16xf32>
    %277 = vector.shape_cast %276 : vector<16xf32> to vector<16x1xf32>
    %278 = arith.addf %272, %277 : vector<16x1xf32>
    %279 = vector.extract_strided_slice %11 {offsets = [0, 2], sizes = [16, 1], strides = [1, 1]} : vector<16x5xf32> to vector<16x1xf32>
    %280 = arith.addf %278, %279 : vector<16x1xf32>
    %cst_50 = arith.constant 1.000000e+02 : f32
    %281 = vector.broadcast %cst_50 : f32 to vector<16x1xf32>
    %282 = arith.mulf %280, %281 : vector<16x1xf32>
    %283 = arith.negf %282 : vector<16x1xf32>
    %284 = math.exp %283 : vector<16x1xf32>
    %cst_51 = arith.constant 1.000000e+00 : f32
    %285 = vector.broadcast %cst_51 : f32 to vector<16x1xf32>
    %286 = arith.addf %285, %284 : vector<16x1xf32>
    %287 = arith.divf %285, %286 : vector<16x1xf32>
    %288 = vector.extract_strided_slice %10 {offsets = [32, 0], sizes = [16, 16], strides = [1, 1]} : vector<80x16xf32> to vector<16x16xf32>
    %289 = vector.broadcast %287 : vector<16x1xf32> to vector<16x16xf32>
    %290 = arith.mulf %289, %288 : vector<16x16xf32>
    %291 = arith.addf %264, %290 : vector<16x16xf32>
    %292 = arith.addf %265, %288 : vector<16x16xf32>
    %293 = vector.extract_strided_slice %176 {offsets = [0, 0], sizes = [16, 32], strides = [1, 1]} : vector<16x64xf32> to vector<16x32xf32>
    %294 = vector.extract_strided_slice %110 {offsets = [0, 32], sizes = [16, 32], strides = [1, 1]} : vector<16x64xf32> to vector<16x32xf32>
    %295 = vector.extract_strided_slice %8 {offsets = [0, 0], sizes = [1, 32], strides = [1, 1]} : vector<1x64xf32> to vector<1x32xf32>
    %296 = vector.broadcast %295 : vector<1x32xf32> to vector<16x32xf32>
    %297 = arith.mulf %293, %296 : vector<16x32xf32>
    %cst_52 = arith.constant dense<0.000000e+00> : vector<16xf32>
    %298 = vector.multi_reduction <add>, %297, %cst_52 [1] : vector<16x32xf32> to vector<16xf32>
    %299 = vector.shape_cast %298 : vector<16xf32> to vector<16x1xf32>
    %300 = vector.extract_strided_slice %8 {offsets = [0, 32], sizes = [1, 32], strides = [1, 1]} : vector<1x64xf32> to vector<1x32xf32>
    %301 = vector.broadcast %300 : vector<1x32xf32> to vector<16x32xf32>
    %302 = arith.mulf %294, %301 : vector<16x32xf32>
    %cst_53 = arith.constant dense<0.000000e+00> : vector<16xf32>
    %303 = vector.multi_reduction <add>, %302, %cst_53 [1] : vector<16x32xf32> to vector<16xf32>
    %304 = vector.shape_cast %303 : vector<16xf32> to vector<16x1xf32>
    %305 = arith.addf %299, %304 : vector<16x1xf32>
    %306 = vector.extract_strided_slice %11 {offsets = [0, 3], sizes = [16, 1], strides = [1, 1]} : vector<16x5xf32> to vector<16x1xf32>
    %307 = arith.addf %305, %306 : vector<16x1xf32>
    %cst_54 = arith.constant 1.000000e+02 : f32
    %308 = vector.broadcast %cst_54 : f32 to vector<16x1xf32>
    %309 = arith.mulf %307, %308 : vector<16x1xf32>
    %310 = arith.negf %309 : vector<16x1xf32>
    %311 = math.exp %310 : vector<16x1xf32>
    %cst_55 = arith.constant 1.000000e+00 : f32
    %312 = vector.broadcast %cst_55 : f32 to vector<16x1xf32>
    %313 = arith.addf %312, %311 : vector<16x1xf32>
    %314 = arith.divf %312, %313 : vector<16x1xf32>
    %315 = vector.extract_strided_slice %10 {offsets = [48, 0], sizes = [16, 16], strides = [1, 1]} : vector<80x16xf32> to vector<16x16xf32>
    %316 = vector.broadcast %314 : vector<16x1xf32> to vector<16x16xf32>
    %317 = arith.mulf %316, %315 : vector<16x16xf32>
    %318 = arith.addf %291, %317 : vector<16x16xf32>
    %319 = arith.addf %292, %315 : vector<16x16xf32>
    %320 = vector.extract_strided_slice %209 {offsets = [0, 0], sizes = [16, 32], strides = [1, 1]} : vector<16x64xf32> to vector<16x32xf32>
    %321 = vector.extract_strided_slice %77 {offsets = [0, 32], sizes = [16, 32], strides = [1, 1]} : vector<16x64xf32> to vector<16x32xf32>
    %322 = vector.extract_strided_slice %8 {offsets = [0, 0], sizes = [1, 32], strides = [1, 1]} : vector<1x64xf32> to vector<1x32xf32>
    %323 = vector.broadcast %322 : vector<1x32xf32> to vector<16x32xf32>
    %324 = arith.mulf %320, %323 : vector<16x32xf32>
    %cst_56 = arith.constant dense<0.000000e+00> : vector<16xf32>
    %325 = vector.multi_reduction <add>, %324, %cst_56 [1] : vector<16x32xf32> to vector<16xf32>
    %326 = vector.shape_cast %325 : vector<16xf32> to vector<16x1xf32>
    %327 = vector.extract_strided_slice %8 {offsets = [0, 32], sizes = [1, 32], strides = [1, 1]} : vector<1x64xf32> to vector<1x32xf32>
    %328 = vector.broadcast %327 : vector<1x32xf32> to vector<16x32xf32>
    %329 = arith.mulf %321, %328 : vector<16x32xf32>
    %cst_57 = arith.constant dense<0.000000e+00> : vector<16xf32>
    %330 = vector.multi_reduction <add>, %329, %cst_57 [1] : vector<16x32xf32> to vector<16xf32>
    %331 = vector.shape_cast %330 : vector<16xf32> to vector<16x1xf32>
    %332 = arith.addf %326, %331 : vector<16x1xf32>
    %333 = vector.extract_strided_slice %11 {offsets = [0, 4], sizes = [16, 1], strides = [1, 1]} : vector<16x5xf32> to vector<16x1xf32>
    %334 = arith.addf %332, %333 : vector<16x1xf32>
    %cst_58 = arith.constant 1.000000e+02 : f32
    %335 = vector.broadcast %cst_58 : f32 to vector<16x1xf32>
    %336 = arith.mulf %334, %335 : vector<16x1xf32>
    %337 = arith.negf %336 : vector<16x1xf32>
    %338 = math.exp %337 : vector<16x1xf32>
    %cst_59 = arith.constant 1.000000e+00 : f32
    %339 = vector.broadcast %cst_59 : f32 to vector<16x1xf32>
    %340 = arith.addf %339, %338 : vector<16x1xf32>
    %341 = arith.divf %339, %340 : vector<16x1xf32>
    %342 = vector.extract_strided_slice %10 {offsets = [64, 0], sizes = [16, 16], strides = [1, 1]} : vector<80x16xf32> to vector<16x16xf32>
    %343 = vector.broadcast %341 : vector<16x1xf32> to vector<16x16xf32>
    %344 = arith.mulf %343, %342 : vector<16x16xf32>
    %345 = arith.addf %318, %344 : vector<16x16xf32>
    %346 = arith.addf %319, %342 : vector<16x16xf32>
    %347 = vector.extract_strided_slice %23 {offsets = [0, 0], sizes = [16, 32], strides = [1, 1]} : vector<16x128xf32> to vector<16x32xf32>
    %348 = vector.extract_strided_slice %23 {offsets = [0, 32], sizes = [16, 32], strides = [1, 1]} : vector<16x128xf32> to vector<16x32xf32>
    %349 = vector.extract_strided_slice %23 {offsets = [0, 64], sizes = [16, 32], strides = [1, 1]} : vector<16x128xf32> to vector<16x32xf32>
    %cst_60 = arith.constant 0.000000e+00 : f32
    %350 = vector.broadcast %cst_60 : f32 to vector<16x32xf32>
    %351 = arith.maximumf %349, %350 : vector<16x32xf32>
    %cst_61 = arith.constant dense<0.000000e+00> : vector<16x16xf32>
    %352 = tpu.matmul %347, %348, %cst_61 {dimension_numbers = #tpu.dot_dimension_numbers<[1], [1], [0], [0], [0, 0, 1, 0], [], []>} : vector<16x32xf32>, vector<16x32xf32>, vector<16x16xf32> -> vector<16x16xf32>
    %cst_62 = arith.constant 0.176776692 : f32
    %353 = vector.broadcast %cst_62 : f32 to vector<16x16xf32>
    %354 = arith.mulf %352, %353 : vector<16x16xf32>
    %cst_63 = arith.constant 1.000000e+00 : f32
    %355 = vector.broadcast %cst_63 : f32 to vector<16x16xf32>
    %356 = arith.subf %346, %355 : vector<16x16xf32>
    %cst_64 = arith.constant 1.000000e+30 : f32
    %357 = vector.broadcast %cst_64 : f32 to vector<16x16xf32>
    %358 = arith.mulf %356, %357 : vector<16x16xf32>
    %359 = arith.addf %354, %358 : vector<16x16xf32>
    %cst_65 = arith.constant dense<0xFF800000> : vector<16xf32>
    %360 = vector.multi_reduction <maximumf>, %359, %cst_65 [1] : vector<16x16xf32> to vector<16xf32>
    %361 = vector.shape_cast %360 : vector<16xf32> to vector<16x1xf32>
    %362 = vector.broadcast %361 : vector<16x1xf32> to vector<16x16xf32>
    %363 = arith.subf %359, %362 : vector<16x16xf32>
    %364 = math.exp %363 : vector<16x16xf32>
    %cst_66 = arith.constant dense<0.000000e+00> : vector<16xf32>
    %365 = vector.multi_reduction <add>, %364, %cst_66 [1] : vector<16x16xf32> to vector<16xf32>
    %366 = vector.shape_cast %365 : vector<16xf32> to vector<16x1xf32>
    %367 = tpu.reciprocal %366 {approx = true} : vector<16x1xf32> -> vector<16x1xf32>
    %368 = vector.broadcast %367 : vector<16x1xf32> to vector<16x16xf32>
    %369 = arith.mulf %364, %368 : vector<16x16xf32>
    %370 = arith.mulf %369, %345 : vector<16x16xf32>
    %cst_67 = arith.constant dense<0.000000e+00> : vector<16x32xf32>
    %371 = tpu.matmul %370, %351, %cst_67 {dimension_numbers = #tpu.dot_dimension_numbers<[1], [0], [0], [1], [0, 0, 1, 1], [], []>} : vector<16x16xf32>, vector<16x32xf32>, vector<16x32xf32> -> vector<16x32xf32>
    %c0_68 = arith.constant 0 : index
    %c0_69 = arith.constant 0 : index
    %372 = vector.load %arg2[%c0_68, %c0_69] : memref<16x32xf32, #tpu.memory_space<vmem>>, vector<16x32xf32>
    %373 = tpu.concatenate %371, %372 in 1 : vector<16x32xf32>, vector<16x32xf32> -> vector<16x64xf32>
    %cst_70 = arith.constant dense<0.000000e+00> : vector<16x256xf32>
    %374 = tpu.matmul %373, %3, %cst_70 {dimension_numbers = #tpu.dot_dimension_numbers<[1], [0], [0], [1], [0, 0, 1, 1], [], []>} : vector<16x64xf32>, vector<64x256xf32>, vector<16x256xf32> -> vector<16x256xf32>
    %375 = vector.broadcast %9 : vector<1x256xf32> to vector<16x256xf32>
    %376 = arith.addf %374, %375 : vector<16x256xf32>
    %377 = vector.extract_strided_slice %376 {offsets = [0, 0], sizes = [16, 128], strides = [1, 1]} : vector<16x256xf32> to vector<16x128xf32>
    %378 = vector.extract_strided_slice %376 {offsets = [0, 128], sizes = [16, 128], strides = [1, 1]} : vector<16x256xf32> to vector<16x128xf32>
    %379 = vector.extract_strided_slice %377 {offsets = [0, 0], sizes = [16, 32], strides = [1, 1]} : vector<16x128xf32> to vector<16x32xf32>
    %380 = vector.extract_strided_slice %378 {offsets = [0, 0], sizes = [16, 32], strides = [1, 1]} : vector<16x128xf32> to vector<16x32xf32>
    %381 = arith.addf %379, %380 : vector<16x32xf32>
    %382 = arith.negf %381 : vector<16x32xf32>
    %383 = math.exp %382 : vector<16x32xf32>
    %cst_71 = arith.constant 1.000000e+00 : f32
    %384 = vector.broadcast %cst_71 : f32 to vector<16x32xf32>
    %385 = arith.addf %384, %383 : vector<16x32xf32>
    %386 = arith.divf %384, %385 : vector<16x32xf32>
    %387 = vector.extract_strided_slice %377 {offsets = [0, 32], sizes = [16, 32], strides = [1, 1]} : vector<16x128xf32> to vector<16x32xf32>
    %388 = vector.extract_strided_slice %378 {offsets = [0, 32], sizes = [16, 32], strides = [1, 1]} : vector<16x128xf32> to vector<16x32xf32>
    %389 = arith.addf %387, %388 : vector<16x32xf32>
    %390 = arith.negf %389 : vector<16x32xf32>
    %391 = math.exp %390 : vector<16x32xf32>
    %cst_72 = arith.constant 1.000000e+00 : f32
    %392 = vector.broadcast %cst_72 : f32 to vector<16x32xf32>
    %393 = arith.addf %392, %391 : vector<16x32xf32>
    %394 = arith.divf %392, %393 : vector<16x32xf32>
    %395 = vector.extract_strided_slice %377 {offsets = [0, 64], sizes = [16, 32], strides = [1, 1]} : vector<16x128xf32> to vector<16x32xf32>
    %396 = vector.extract_strided_slice %378 {offsets = [0, 64], sizes = [16, 32], strides = [1, 1]} : vector<16x128xf32> to vector<16x32xf32>
    %397 = arith.mulf %386, %396 : vector<16x32xf32>
    %398 = arith.addf %395, %397 : vector<16x32xf32>
    %399 = math.tanh %398 : vector<16x32xf32>
    %cst_73 = arith.constant 1.000000e+00 : f32
    %400 = vector.broadcast %cst_73 : f32 to vector<16x32xf32>
    %401 = arith.subf %400, %394 : vector<16x32xf32>
    %402 = arith.mulf %401, %399 : vector<16x32xf32>
    %403 = arith.mulf %394, %372 : vector<16x32xf32>
    %404 = arith.addf %402, %403 : vector<16x32xf32>
    %c0_74 = arith.constant 0 : index
    %c0_75 = arith.constant 0 : index
    %405 = vector.load %arg6[%c0_74, %c0_75] : memref<16x32xf32, #tpu.memory_space<vmem>>, vector<16x32xf32>
    tpu.vector_store %arg6[%c0_74, %c0_75], %404 {strides = array<i32>} : memref<16x32xf32, #tpu.memory_space<vmem>>, vector<16x32xf32>,
    return
  }
  func.func @transform_0(%arg0: i32) -> (i32, i32) {
    %c0_i32 = arith.constant 0 : i32
    %c0_i32_0 = arith.constant 0 : i32
    return %arg0, %c0_i32 : i32, i32
  }
  func.func @transform_1(%arg0: i32) -> (i32, i32) {
    %c0_i32 = arith.constant 0 : i32
    %c0_i32_0 = arith.constant 0 : i32
    return %arg0, %c0_i32 : i32, i32
  }
  func.func @transform_2(%arg0: i32) -> (i32, i32) {
    %c0_i32 = arith.constant 0 : i32
    %c0_i32_0 = arith.constant 0 : i32
    return %arg0, %c0_i32 : i32, i32
  }
  func.func @transform_3(%arg0: i32) -> (i32, i32) {
    %c0_i32 = arith.constant 0 : i32
    %c0_i32_0 = arith.constant 0 : i32
    %c0_i32_1 = arith.constant 0 : i32
    return %c0_i32, %c0_i32_0 : i32, i32
  }
  func.func @transform_4(%arg0: i32) -> (i32, i32) {
    %c0_i32 = arith.constant 0 : i32
    %c0_i32_0 = arith.constant 0 : i32
    %c0_i32_1 = arith.constant 0 : i32
    return %c0_i32, %c0_i32_0 : i32, i32
  }
  func.func @transform_5(%arg0: i32) -> (i32, i32) {
    %c0_i32 = arith.constant 0 : i32
    %c0_i32_0 = arith.constant 0 : i32
    return %arg0, %c0_i32 : i32, i32
  }
}

</mosaic_0001>

<llo_original>
// kernel: gat_net_forward.1
$region0: #{gat_net_forward.1}
  #allocation0 [shape = 'u32[]', space=smem, size = 0x4, offset = 0x4, fixed_abs, tag = 'smem constant byte address 0x4 - core index']
  #allocation1 [shape = 'u32[144,128]{1,0:T(1,128)}', space=vmem, size = 0x12000, scoped, tag = 'internal scratch']
  %s0 = inlined_call_operand.vmem [shape: f32[32,16], index: 0, kind: input, shape index: {}]
  %s1 = inlined_call_operand.vmem [shape: f32[32,32], index: 1, kind: input, shape index: {}]
  %s2 = inlined_call_operand.vmem [shape: f32[32,5], index: 2, kind: input, shape index: {}]
  %s3 = inlined_call_operand.vmem [shape: f32[80,16], index: 3, kind: input, shape index: {}]
  %s4 = inlined_call_operand.hbm [shape: f32[120,640], index: 4, kind: input, shape index: {}]
  %s5 = inlined_call_operand.vmem [shape: f32[32,32], index: 5, kind: output, shape index: {}]
  %s6 = sld [smem:[#allocation0]]
  $region57: #{gat_net_forward.1} parent=0
    _
  %s8 = ssub.s32 1, %s6
  %s9 = scalar_select 0, %s8, %s6
  $region1: #{gat_net_forward.1} parent=0
    #allocation2 [shape = 'u8[307200]{0}', space=vmem, size = 0x4b000, scoped, tag = 'input window, operand 4, single buffered']
    #allocation3 [shape = 's32[2]{0}', space=sflag, size = 0x8, scoped, tag = 'scoped memory for gat_net_forward.1']
    %10 = vsyncpa [#allocation3], 0
    loop: start=0, step=1, limit=4
    $region2: #{gat_net_forward.1} parent=1 // loop_pre_header
      _
    $region3: #{gat_net_forward.1} parent=1 // loop_header
      %s12 = sphi 0, %s16
      %p13 = scmp.ge.s32.totalorder %s12, 4
      %s22 = sphi 0, %s24
      %s25 = sphi 0, %s22
      %s26 = sphi 0, %s25
      %s42 = sphi 0, %s26
      %s48 = sphi 0, %s50
      %s51 = sphi 0, %s48
      %s52 = sphi 0, %s51
      %s68 = sphi 0, %s52
      %s74 = sphi 0, %s76
      %s77 = sphi 0, %s74
      %s78 = sphi 0, %s77
      %s94 = sphi 0, %s78
      %s98 = sphi 0, %s98
      %s100 = sphi 0, %s98
      %s101 = sphi 0, %s100
      %s115 = sphi 0, %s101
      %s119 = sphi 0, %s119
      %s121 = sphi 0, %s119
      %s122 = sphi 0, %s121
      %s136 = sphi 0, %s122
      %s142 = sphi 0, %s144
      %s145 = sphi 0, %s142
      %s146 = sphi 0, %s145
      %s162 = sphi 0, %s146
    $region4: #{gat_net_forward.1} parent=1 // loop_header_branch
      %15 = sbr.rel (%p13) target = $region8
    $region5: #{gat_net_forward.1} parent=1 // loop_body
      %s17 = ssub.s32 %s12, 1
      %s18 = ssub.s32 %s12, 2
      %s19 = sadd.s32 %s12, 1
      %s20 = ssub.s32 %s12, %s19
      %p21 = scmp.eq.s32.totalorder %s20, 0
      %s23 = sadd.s32 %s22, 1
      %s24 = scalar_select %p21, %s22, %s23
      %p27 = pneg %p21
      %p28 = scmp.eq.s32.totalorder %s12, 1
      %p29 = por %p27, %p28
      %p30 = scmp.ne.s32.totalorder %s22, %s25
      %p31 = scmp.eq.s32.totalorder %s12, 0
      %p32 = por %p30, %p31
      %p33 = scmp.ne.s32.totalorder %s22, %s25
      %p34 = scmp.eq.s32.totalorder %s17, 1
      %p35 = por %p33, %p34
      %p36 = scmp.ne.s32.totalorder %s25, %s26
      %p37 = scmp.eq.s32.totalorder %s17, 0
      %p38 = por %p36, %p37
      %p39 = scmp.ne.s32.totalorder %s25, %s26
      %p40 = scmp.eq.s32.totalorder %s18, 1
      %p41 = por %p39, %p40
      %p43 = scmp.ne.s32.totalorder %s26, %s42
      %p44 = scmp.eq.s32.totalorder %s18, 0
      %p45 = por %p43, %p44
      %s46 = ssub.s32 %s12, %s19
      %p47 = scmp.eq.s32.totalorder %s46, 0
      %s49 = sadd.s32 %s48, 1
      %s50 = scalar_select %p47, %s48, %s49
      %p53 = pneg %p47
      %p54 = scmp.eq.s32.totalorder %s12, 1
      %p55 = por %p53, %p54
      %p56 = scmp.ne.s32.totalorder %s48, %s51
      %p57 = scmp.eq.s32.totalorder %s12, 0
      %p58 = por %p56, %p57
      %p59 = scmp.ne.s32.totalorder %s48, %s51
      %p60 = scmp.eq.s32.totalorder %s17, 1
      %p61 = por %p59, %p60
      %p62 = scmp.ne.s32.totalorder %s51, %s52
      %p63 = scmp.eq.s32.totalorder %s17, 0
      %p64 = por %p62, %p63
      %p65 = scmp.ne.s32.totalorder %s51, %s52
      %p66 = scmp.eq.s32.totalorder %s18, 1
      %p67 = por %p65, %p66
      %p69 = scmp.ne.s32.totalorder %s52, %s68
      %p70 = scmp.eq.s32.totalorder %s18, 0
      %p71 = por %p69, %p70
      %s72 = ssub.s32 %s12, %s19
      %p73 = scmp.eq.s32.totalorder %s72, 0
      %s75 = sadd.s32 %s74, 1
      %s76 = scalar_select %p73, %s74, %s75
      %p79 = pneg %p73
      %p80 = scmp.eq.s32.totalorder %s12, 1
      %p81 = por %p79, %p80
      %p82 = scmp.ne.s32.totalorder %s74, %s77
      %p83 = scmp.eq.s32.totalorder %s12, 0
      %p84 = por %p82, %p83
      %p85 = scmp.ne.s32.totalorder %s74, %s77
      %p86 = scmp.eq.s32.totalorder %s17, 1
      %p87 = por %p85, %p86
      %p88 = scmp.ne.s32.totalorder %s77, %s78
      %p89 = scmp.eq.s32.totalorder %s17, 0
      %p90 = por %p88, %p89
      %p91 = scmp.ne.s32.totalorder %s77, %s78
      %p92 = scmp.eq.s32.totalorder %s18, 1
      %p93 = por %p91, %p92
      %p95 = scmp.ne.s32.totalorder %s78, %s94
      %p96 = scmp.eq.s32.totalorder %s18, 0
      %p97 = por %p95, %p96
      %s99 = sadd.s32 %s98, 1
      %p102 = scmp.eq.s32.totalorder %s12, 1
      %p103 = scmp.ne.s32.totalorder %s98, %s100
      %p104 = scmp.eq.s32.totalorder %s12, 0
      %p105 = por %p103, %p104
      %p106 = scmp.ne.s32.totalorder %s98, %s100
      %p107 = scmp.eq.s32.totalorder %s17, 1
      %p108 = por %p106, %p107
      %p109 = scmp.ne.s32.totalorder %s100, %s101
      %p110 = scmp.eq.s32.totalorder %s17, 0
      %p111 = por %p109, %p110
      %p112 = scmp.ne.s32.totalorder %s100, %s101
      %p113 = scmp.eq.s32.totalorder %s18, 1
      %p114 = por %p112, %p113
      %p116 = scmp.ne.s32.totalorder %s101, %s115
      %p117 = scmp.eq.s32.totalorder %s18, 0
      %p118 = por %p116, %p117
      %s120 = sadd.s32 %s119, 1
      %p123 = scmp.eq.s32.totalorder %s12, 1
      %p124 = scmp.ne.s32.totalorder %s119, %s121
      %p125 = scmp.eq.s32.totalorder %s12, 0
      %p126 = por %p124, %p125
      %p127 = scmp.ne.s32.totalorder %s119, %s121
      %p128 = scmp.eq.s32.totalorder %s17, 1
      %p129 = por %p127, %p128
      %p130 = scmp.ne.s32.totalorder %s121, %s122
      %p131 = scmp.eq.s32.totalorder %s17, 0
      %p132 = por %p130, %p131
      %p133 = scmp.ne.s32.totalorder %s121, %s122
      %p134 = scmp.eq.s32.totalorder %s18, 1
      %p135 = por %p133, %p134
      %p137 = scmp.ne.s32.totalorder %s122, %s136
      %p138 = scmp.eq.s32.totalorder %s18, 0
      %p139 = por %p137, %p138
      %s140 = ssub.s32 %s12, %s19
      %p141 = scmp.eq.s32.totalorder %s140, 0
      %s143 = sadd.s32 %s142, 1
      %s144 = scalar_select %p141, %s142, %s143
      %p147 = pneg %p141
      %p148 = scmp.eq.s32.totalorder %s12, 1
      %p149 = por %p147, %p148
      %p150 = scmp.ne.s32.totalorder %s142, %s145
      %p151 = scmp.eq.s32.totalorder %s12, 0
      %p152 = por %p150, %p151
      %p153 = scmp.ne.s32.totalorder %s142, %s145
      %p154 = scmp.eq.s32.totalorder %s17, 1
      %p155 = por %p153, %p154
      %p156 = scmp.ne.s32.totalorder %s145, %s146
      %p157 = scmp.eq.s32.totalorder %s17, 0
      %p158 = por %p156, %p157
      %p159 = scmp.ne.s32.totalorder %s145, %s146
      %p160 = scmp.eq.s32.totalorder %s18, 1
      %p161 = por %p159, %p160
      %p163 = scmp.ne.s32.totalorder %s146, %s162
      %p164 = scmp.eq.s32.totalorder %s18, 0
      %p165 = por %p163, %p164
      %p166 = scmp.le.s32.totalorder 1, %s12
      %p167 = scmp.lt.s32.totalorder %s12, 3
      %p168 = pnand %p166, %p167
      %p169 = pneg %p168
      // Predicated region
      $region9: #{gat_net_forward.1} parent=5 // pred_check
        _
      $region10: #{gat_net_forward.1} parent=5 // pred_check_branch
        %171 = sbr.rel (%p168) target = $region12
      $region11: #{gat_net_forward.1} parent=5 // pred_region
        %s172 = ssub.s32 %s12, 1
        // Predicated region
        $region13: #{gat_net_forward.1} parent=11 // pred_check
          %p173 = pneg %p111
        $region14: #{gat_net_forward.1} parent=11 // pred_check_branch
          %175 = sbr.rel (%p173) target = $region16
        $region15: #{gat_net_forward.1} parent=11 // pred_region
          _
        $region16: #{gat_net_forward.1} parent=11 // pred_fallthru
          _
        // Predicated region
        $region17: #{gat_net_forward.1} parent=11 // pred_check
          %p176 = pneg %p132
        $region18: #{gat_net_forward.1} parent=11 // pred_check_branch
          %178 = sbr.rel (%p176) target = $region20
        $region19: #{gat_net_forward.1} parent=11 // pred_region
          %s180 = ssub.s32 9600, 9600
          %181 = vsyncadd [#allocation3], %s180
          %s182 = sshll.u32 [#allocation2], 4
          %s183 = int_to_ptr.vmem [resolvable:$true] %s182
          %188 = dma.hbm_to_vmem [thread:$0]  %s4, 9600, %s183, [#allocation3], 640, 640, 40
        $region20: #{gat_net_forward.1} parent=11 // pred_fallthru
          _
      $region12: #{gat_net_forward.1} parent=5 // pred_fallthru
        _
      %p189 = scmp.lt.s32.totalorder %s12, 2
      // Predicated region
      $region21: #{gat_net_forward.1} parent=5 // pred_check
        %p190 = pneg %p189
      $region22: #{gat_net_forward.1} parent=5 // pred_check_branch
        %192 = sbr.rel (%p190) target = $region24
      $region23: #{gat_net_forward.1} parent=5 // pred_region
        // Predicated region
        $region25: #{gat_net_forward.1} parent=23 // pred_check
          %p193 = pneg %p32
        $region26: #{gat_net_forward.1} parent=23 // pred_check_branch
          %195 = sbr.rel (%p193) target = $region28
        $region27: #{gat_net_forward.1} parent=23 // pred_region
          %s196 = smul.u32 2, %s12
          %p197 = scmp.lt.s32.totalorder %s196, 3
          %s198 = scalar_select %p197, %s196, 3
          %s199 = smul.addr %s198, 8
          %s200 = scalar_lea.vmem %s0, %s199
          %s201 = smul.u32 2, %s12
        $region28: #{gat_net_forward.1} parent=23 // pred_fallthru
          _
        // Predicated region
        $region29: #{gat_net_forward.1} parent=23 // pred_check
          %p202 = pneg %p58
        $region30: #{gat_net_forward.1} parent=23 // pred_check_branch
          %204 = sbr.rel (%p202) target = $region32
        $region31: #{gat_net_forward.1} parent=23 // pred_region
          %s205 = smul.u32 2, %s12
          %p206 = scmp.lt.s32.totalorder %s205, 3
          %s207 = scalar_select %p206, %s205, 3
          %s208 = smul.addr %s207, 8
          %s209 = scalar_lea.vmem %s1, %s208
          %s210 = smul.u32 2, %s12
        $region32: #{gat_net_forward.1} parent=23 // pred_fallthru
          _
        // Predicated region
        $region33: #{gat_net_forward.1} parent=23 // pred_check
          %p211 = pneg %p84
        $region34: #{gat_net_forward.1} parent=23 // pred_check_branch
          %213 = sbr.rel (%p211) target = $region36
        $region35: #{gat_net_forward.1} parent=23 // pred_region
          %s214 = smul.u32 2, %s12
          %p215 = scmp.lt.s32.totalorder %s214, 3
          %s216 = scalar_select %p215, %s214, 3
          %s217 = smul.addr %s216, 8
          %s218 = scalar_lea.vmem %s2, %s217
          %s219 = smul.u32 2, %s12
        $region36: #{gat_net_forward.1} parent=23 // pred_fallthru
          _
      $region24: #{gat_net_forward.1} parent=5 // pred_fallthru
        _
      %p220 = scmp.le.s32.totalorder 1, %s12
      %p221 = scmp.lt.s32.totalorder %s12, 3
      %p222 = pnand %p220, %p221
      %p223 = pneg %p222
      // Predicated region
      $region37: #{gat_net_forward.1} parent=5 // pred_check
        _
      $region38: #{gat_net_forward.1} parent=5 // pred_check_branch
        %225 = sbr.rel (%p222) target = $region40
      $region39: #{gat_net_forward.1} parent=5 // pred_region
        %s226 = ssub.s32 %s12, 1
        // Predicated region
        $region41: #{gat_net_forward.1} parent=39 // pred_check
          %p227 = pneg %p132
        $region42: #{gat_net_forward.1} parent=39 // pred_check_branch
          %229 = sbr.rel (%p227) target = $region44
        $region43: #{gat_net_forward.1} parent=39 // pred_region
          %230 = dma.done [#allocation3], 9600
        $region44: #{gat_net_forward.1} parent=39 // pred_fallthru
          _
        %s231 = smul.u32 2, %s17
        %p232 = scmp.lt.s32.totalorder %s231, 3
        %s233 = scalar_select %p232, %s231, 3
        %s234 = smul.addr %s233, 8
        %s235 = scalar_lea.vmem %s0, %s234
        %p236 = pneg %p38
        %p237 = pneg %p35
        %s238 = smul.u32 2, %s17
        %p239 = scmp.lt.s32.totalorder %s238, 3
        %s240 = scalar_select %p239, %s238, 3
        %s241 = smul.addr %s240, 8
        %s242 = scalar_lea.vmem %s1, %s241
        %p243 = pneg %p64
        %p244 = pneg %p61
        %s245 = smul.u32 2, %s17
        %p246 = scmp.lt.s32.totalorder %s245, 3
        %s247 = scalar_select %p246, %s245, 3
        %s248 = smul.addr %s247, 8
        %s249 = scalar_lea.vmem %s2, %s248
        %p250 = pneg %p90
        %p251 = pneg %p87
        %p252 = pneg %p111
        %p253 = pneg %p108
        %p254 = pneg %p132
        %p255 = pneg %p129
        %p256 = pneg %p158
        %p257 = pneg %p155
        %s258 = smul.u32 2, %s17
        %p259 = scmp.lt.s32.totalorder %s258, 3
        %s260 = scalar_select %p259, %s258, 3
        %s261 = smul.addr %s260, 8
        %s262 = scalar_lea.vmem %s5, %s261
        %s263 = smul.u32 2, %s17
        %p264 = scmp.lt.s32.totalorder %s263, 3
        %s265 = scalar_select %p264, %s263, 3
        %s266 = smul.addr %s265, 8
        %s267 = scalar_lea.vmem %s0, %s266
        %s268 = smul.u32 2, %s17
        %s269 = smul.u32 2, %s17
        %p270 = scmp.lt.s32.totalorder %s269, 3
        %s271 = scalar_select %p270, %s269, 3
        %s272 = smul.addr %s271, 8
        %s273 = scalar_lea.vmem %s1, %s272
        %s274 = smul.u32 2, %s17
        %s275 = smul.u32 2, %s17
        %p276 = scmp.lt.s32.totalorder %s275, 3
        %s277 = scalar_select %p276, %s275, 3
        %s278 = smul.addr %s277, 8
        %s279 = scalar_lea.vmem %s2, %s278
        %s280 = smul.u32 2, %s17
        %s281 = smul.u32 2, %s17
        %p282 = scmp.lt.s32.totalorder %s281, 3
        %s283 = scalar_select %p282, %s281, 3
        %s284 = smul.addr %s283, 8
        %s285 = scalar_lea.vmem %s5, %s284
        %s286 = smul.u32 2, %s17
        %v287 = vld [vmem:[#allocation2] sm:$0xff]
        %v288 = vld [vmem:[#allocation2 + $0x28] sm:$0xff]
        %v289 = vld [vmem:[#allocation2 + $0x50] sm:$0xff]
        %v290 = vld [vmem:[#allocation2 + $0x58] sm:$0xff]
        %v291 = vld [vmem:[#allocation2 + $0x60] sm:$0xff]
        %v292 = vld [vmem:[#allocation2 + $0x68] sm:$0xff]
        %v293 = vld [vmem:[#allocation2 + $0x70] sm:$0xff]
        %v294 = vld [vmem:[#allocation2 + $0x78] sm:$0xff]
        %v295 = vld [vmem:[#allocation2 + $0x80] sm:$0xff]
        %v296 = vld [vmem:[#allocation2 + $0x88] sm:$0xff]
        %v297 = vld [vmem:[#allocation2 + $0x90] sm:$0xff]
        %v298 = vld [vmem:[#allocation2 + $0x98] sm:$0xff]
        %v299 = vld [vmem:[#allocation2 + $0xa0] sm:$0xff]
        %v300 = vld [vmem:[#allocation2 + $0xa8] sm:$0xff]
        %v301 = vld [vmem:[#allocation2 + $0xb0] sm:$0xff]
        %v302 = vld [vmem:[#allocation2 + $0xb8] sm:$0xff]
        %v303 = vld [vmem:[#allocation2 + $0xc0] sm:$0xff]
        %v304 = vld [vmem:[#allocation2 + $0xc8] sm:$0xff]
        %v305 = vld [vmem:[#allocation2 + $0xd0] sm:$0xff]
        %v306 = vld [vmem:[#allocation2 + $0xd8] sm:$0xff]
        %v307 = vld [vmem:[#allocation2 + $0xe0] sm:$0xff]
        %v308 = vld [vmem:[#allocation2 + $0xe8] sm:$0xff]
        %v309 = vld [vmem:[#allocation2 + $0xf0] sm:$0xff]
        %v310 = vld [vmem:[#allocation2 + $0xf8] sm:$0xff]
        %v311 = vld [vmem:[#allocation2 + $0x118] sm:$0xff]
        %v312 = vld [vmem:[#allocation2 + $0x120] sm:$0xff]
        %v313 = vld [vmem:[#allocation2 + $0x140] sm:$0xff]
        %v314 = vld [vmem:[#allocation2 + $0x148] sm:$0xff]
        %v315 = vld [vmem:[#allocation2 + $0x168] sm:$0xff]
        %v316 = vld [vmem:[#allocation2 + $0x170] sm:$0xff]
        %v317 = vld [vmem:[#allocation2 + $0x190] sm:$0xff]
        %v318 = vld [vmem:[#allocation2 + $0x198] sm:$0xff]
        %v319 = vld [vmem:[#allocation2 + $0x1b8] sm:$0xff]
        %v320 = vld [vmem:[#allocation2 + $0x1c0] sm:$0xff]
        %v321 = vld [vmem:[#allocation2 + $0x1e0] sm:$0xff]
        %v322 = vld [vmem:[#allocation2 + $0x1e8] sm:$0xff]
        %v323 = vld [vmem:[#allocation2 + $0x208] sm:$0xff]
        %v324 = vld [vmem:[#allocation2 + $0x210] sm:$0xff]
        %v325 = vld [vmem:[#allocation2 + $0x100] sm:$0xff]
        %v326 = vld [vmem:[#allocation2 + $0x108] sm:$0xff]
        %v327 = vld [vmem:[#allocation2 + $0x128] sm:$0xff]
        %v328 = vld [vmem:[#allocation2 + $0x130] sm:$0xff]
        %v329 = vld [vmem:[#allocation2 + $0x150] sm:$0xff]
        %v330 = vld [vmem:[#allocation2 + $0x158] sm:$0xff]
        %v331 = vld [vmem:[#allocation2 + $0x178] sm:$0xff]
        %v332 = vld [vmem:[#allocation2 + $0x180] sm:$0xff]
        %v333 = vld [vmem:[#allocation2 + $0x1a0] sm:$0xff]
        %v334 = vld [vmem:[#allocation2 + $0x1a8] sm:$0xff]
        %v335 = vld [vmem:[#allocation2 + $0x1c8] sm:$0xff]
        %v336 = vld [vmem:[#allocation2 + $0x1d0] sm:$0xff]
        %v337 = vld [vmem:[#allocation2 + $0x1f0] sm:$0xff]
        %v338 = vld [vmem:[#allocation2 + $0x1f8] sm:$0xff]
        %v339 = vld [vmem:[#allocation2 + $0x218] sm:$0xff]
        %v340 = vld [vmem:[#allocation2 + $0x220] sm:$0xff]
        %v341 = vld [vmem:[#allocation2 + $0x230] sm:$0xff]
        %v342 = vld [vmem:[#allocation2 + $0x238] sm:$0xff]
        %v343 = vld [vmem:[#allocation2 + $0x240] sm:$0xff]
        %v344 = vld [vmem:[#allocation2 + $0x248] sm:$0xff]
        %v345 = vld [vmem:[#allocation2 + $0x250] sm:$0xff]
        %v346 = vld [vmem:[%s3] sm:$0xff]
        %v347 = vld [vmem:[%s3 + $0x8] sm:$0xff]
        %v348 = vld [vmem:[%s3 + $0x10] sm:$0xff]
        %v349 = vld [vmem:[%s3 + $0x18] sm:$0xff]
        %v350 = vld [vmem:[%s3 + $0x20] sm:$0xff]
        %v351 = vld [vmem:[%s3 + $0x28] sm:$0xff]
        %v352 = vld [vmem:[%s3 + $0x30] sm:$0xff]
        %v353 = vld [vmem:[%s3 + $0x38] sm:$0xff]
        %v354 = vld [vmem:[%s3 + $0x40] sm:$0xff]
        %v355 = vld [vmem:[%s3 + $0x48] sm:$0xff]
        %v356 = vld [vmem:[%s279] sm:$0xff]
        %v357 = vld [vmem:[%s279 + $0x8] sm:$0xff]
        %v358 = vld [vmem:[%s267] sm:$0xff]
        %v359 = vld [vmem:[%s267 + $0x8] sm:$0xff]
        %v360 = vlaneseq
        %v361 = vshrl.u32 %v360, 7
        %v362 = vsub.s32 0, %v361
        %v363 = vrot.slane %v341, %v362
        %vm364 = vcmask 130048
        %v366 = vsel %vm364, %v358, 0
        %v369 = vsel %vm364, %v359, 0
        %371 = vmatprep.subr.mxu0 0.0
        %372 = vmatpush1.msra.mxu0 %v287
        %373 = vmatprep.subr.mxu0 0.0
        %374 = vmatpush1.msra.mxu0 %v288
        %375 = vmatprep.subr.mxu0 0.0
        %376 = vmatpush1.msra.mxu0 0.0
        %377 = vmatprep.subr.mxu0 0.0
        %378 = vmatpush1.msra.mxu0 0.0
        %379 = vmatprep.subr.mxu0 0.0
        %380 = vmatpush1.msra.mxu0 0.0
        %381 = vmatprep.subr.mxu0 0.0
        %382 = vmatpush1.msra.mxu0 0.0
        %383 = vmatprep.subr.mxu0 0.0
        %384 = vmatpush1.msra.mxu0 0.0
        %385 = vmatprep.subr.mxu0 0.0
        %386 = vmatpush1.msra.mxu0 0.0
        %387 = vmatprep.subr.mxu0 0.0
        %388 = vmatpush1.msra.mxu0 0.0
        %389 = vmatprep.subr.mxu0 0.0
        %390 = vmatpush1.msra.mxu0 0.0
        %391 = vmatprep.subr.mxu0 0.0
        %392 = vmatpush1.msra.mxu0 0.0
        %393 = vmatprep.subr.mxu0 0.0
        %394 = vmatpush1.msra.mxu0 0.0
        %395 = vmatprep.subr.mxu0 0.0
        %396 = vmatpush1.msra.mxu0 0.0
        %397 = vmatprep.subr.mxu0 0.0
        %398 = vmatpush1.msra.mxu0 0.0
        %399 = vmatprep.subr.mxu0 0.0
        %400 = vmatpush1.msra.mxu0 0.0
        %401 = vmatprep.subr.mxu0 0.0
        %402 = vmatpush1.msra.mxu0 0.0
        %403 = vmatprep.subr.mxu0 0.0
        %404 = vmatpush1.msra.mxu0 0.0
        %405 = vmatprep.subr.mxu0 0.0
        %406 = vmatpush1.msra.mxu0 0.0
        %407 = vmatprep.subr.mxu0 0.0
        %408 = vmatpush1.msra.mxu0 0.0
        %409 = vmatprep.subr.mxu0 0.0
        %410 = vmatpush1.msra.mxu0 0.0
        %411 = vmatprep.subr.mxu0 0.0
        %412 = vmatpush1.msra.mxu0 0.0
        %413 = vmatprep.subr.mxu0 0.0
        %414 = vmatpush1.msra.mxu0 0.0
        %415 = vmatprep.subr.mxu0 0.0
        %416 = vmatpush1.msra.mxu0 0.0
        %417 = vmatprep.subr.mxu0 0.0
        %418 = vmatpush1.msra.mxu0 0.0
        %419 = vmatprep.subr.mxu0 0.0
        %420 = vmatpush1.msra.mxu0 0.0
        %421 = vmatprep.subr.mxu0 0.0
        %422 = vmatpush1.msra.mxu0 0.0
        %423 = vmatprep.subr.mxu0 0.0
        %424 = vmatpush1.msra.mxu0 0.0
        %425 = vmatprep.subr.mxu0 0.0
        %426 = vmatpush1.msra.mxu0 0.0
        %427 = vmatprep.subr.mxu0 0.0
        %428 = vmatpush1.msra.mxu0 0.0
        %429 = vmatprep.subr.mxu0 0.0
        %430 = vmatpush1.msra.mxu0 0.0
        %431 = vmatprep.subr.mxu0 0.0
        %432 = vmatpush1.msra.mxu0 0.0
        %433 = vmatprep.subr.mxu0 0.0
        %434 = vmatpush1.msra.mxu0 0.0
        %435 = vmatprep.mubr.f32.mxu0 0.0
        %436 = vmatmul.mubr.f32.gmra.mrb[0].mxu0 %v366
        %v437 = vpop.f32.mrb[0].mxu0
        %v438 = vadd.f32 %v363, %v437
        %v439 = vpop.f32.mrb[0].mxu0
        %440 = vmatprep.mubr.f32.mxu0 0.0
        %441 = vmatmul.mubr.f32.gmra.mrb[0].mxu0 %v369
        %v442 = vpop.f32.mrb[0].mxu0
        %v443 = vadd.f32 %v363, %v442
        %v444 = vpop.f32.mrb[0].mxu0
        %445 = vdwg.mxu0
        %v446 = vmax.f32 %v438, 0.0
        %v447 = vmax.f32 %v443, 0.0
        %v448 = vlaneseq
        %v449 = vshrl.u32 %v448, 7
        %v450 = vsub.s32 1, %v449
        %v451 = vrot.slane %v341, %v450
        %v452 = vlaneseq
        %v453 = vshrl.u32 %v452, 7
        %v454 = vsub.s32 1, %v453
        %v455 = vrot.slane %v342, %v454
        %v456 = vlaneseq
        %v457 = vshrl.u32 %v456, 7
        %v458 = vsub.s32 1, %v457
        %v459 = vrot.slane %v343, %v458
        %v460 = vlaneseq
        %v461 = vshrl.u32 %v460, 7
        %v462 = vsub.s32 1, %v461
        %v463 = vrot.slane %v344, %v462
        %v464 = vlaneseq
        %v465 = vshrl.u32 %v464, 7
        %v466 = vsub.s32 1, %v465
        %v467 = vrot.slane %v345, %v466
        %vm468 = vcmask 261120
        %v470 = vsel %vm468, %v446, 0
        %v473 = vsel %vm468, %v447, 0
        %475 = vmatprep.subr.mxu0 %v290
        %476 = vmatpush1.msra.mxu0 %v289
        %477 = vmatprep.subr.mxu0 %v295
        %478 = vmatpush1.msra.mxu0 %v294
        %479 = vmatprep.subr.mxu0 %v300
        %480 = vmatpush1.msra.mxu0 %v299
        %481 = vmatprep.subr.mxu0 %v305
        %482 = vmatpush1.msra.mxu0 %v304
        %483 = vmatprep.subr.mxu0 0.0
        %484 = vmatpush1.msra.mxu0 0.0
        %485 = vmatprep.subr.mxu0 0.0
        %486 = vmatpush1.msra.mxu0 0.0
        %487 = vmatprep.subr.mxu0 0.0
        %488 = vmatpush1.msra.mxu0 0.0
        %489 = vmatprep.subr.mxu0 0.0
        %490 = vmatpush1.msra.mxu0 0.0
        %491 = vmatprep.subr.mxu0 0.0
        %492 = vmatpush1.msra.mxu0 0.0
        %493 = vmatprep.subr.mxu0 0.0
        %494 = vmatpush1.msra.mxu0 0.0
        %495 = vmatprep.subr.mxu0 0.0
        %496 = vmatpush1.msra.mxu0 0.0
        %497 = vmatprep.subr.mxu0 0.0
        %498 = vmatpush1.msra.mxu0 0.0
        %499 = vmatprep.subr.mxu0 0.0
        %500 = vmatpush1.msra.mxu0 0.0
        %501 = vmatprep.subr.mxu0 0.0
        %502 = vmatpush1.msra.mxu0 0.0
        %503 = vmatprep.subr.mxu0 0.0
        %504 = vmatpush1.msra.mxu0 0.0
        %505 = vmatprep.subr.mxu0 0.0
        %506 = vmatpush1.msra.mxu0 0.0
        %507 = vmatprep.subr.mxu0 0.0
        %508 = vmatpush1.msra.mxu0 0.0
        %509 = vmatprep.subr.mxu0 0.0
        %510 = vmatpush1.msra.mxu0 0.0
        %511 = vmatprep.subr.mxu0 0.0
        %512 = vmatpush1.msra.mxu0 0.0
        %513 = vmatprep.subr.mxu0 0.0
        %514 = vmatpush1.msra.mxu0 0.0
        %515 = vmatprep.subr.mxu0 0.0
        %516 = vmatpush1.msra.mxu0 0.0
        %517 = vmatprep.subr.mxu0 0.0
        %518 = vmatpush1.msra.mxu0 0.0
        %519 = vmatprep.subr.mxu0 0.0
        %520 = vmatpush1.msra.mxu0 0.0
        %521 = vmatprep.subr.mxu0 0.0
        %522 = vmatpush1.msra.mxu0 0.0
        %523 = vmatprep.subr.mxu0 0.0
        %524 = vmatpush1.msra.mxu0 0.0
        %525 = vmatprep.subr.mxu0 0.0
        %526 = vmatpush1.msra.mxu0 0.0
        %527 = vmatprep.subr.mxu0 0.0
        %528 = vmatpush1.msra.mxu0 0.0
        %529 = vmatprep.subr.mxu0 0.0
        %530 = vmatpush1.msra.mxu0 0.0
        %531 = vmatprep.subr.mxu0 0.0
        %532 = vmatpush1.msra.mxu0 0.0
        %533 = vmatprep.subr.mxu0 0.0
        %534 = vmatpush1.msra.mxu0 0.0
        %535 = vmatprep.subr.mxu0 0.0
        %536 = vmatpush1.msra.mxu0 0.0
        %537 = vmatprep.subr.mxu0 0.0
        %538 = vmatpush1.msra.mxu0 0.0
        %539 = vmatprep.mubr.f32.mxu0 0.0
        %540 = vmatmul.mubr.f32.gmra.mrb[0].mxu0 %v470
        %v541 = vpop.f32.mrb[0].mxu0
        %v542 = vadd.f32 %v451, %v541
        %v543 = vpop.f32.mrb[0].mxu0
        %v544 = vadd.f32 %v455, %v543
        %545 = vmatprep.mubr.f32.mxu0 0.0
        %546 = vmatmul.mubr.f32.gmra.mrb[0].mxu0 %v473
        %v547 = vpop.f32.mrb[0].mxu0
        %v548 = vadd.f32 %v451, %v547
        %v549 = vpop.f32.mrb[0].mxu0
        %v550 = vadd.f32 %v455, %v549
        %551 = vdwg.mxu0
        %552 = vmatprep.subr.mxu0 %v292
        %553 = vmatpush1.msra.mxu0 %v291
        %554 = vmatprep.subr.mxu0 %v297
        %555 = vmatpush1.msra.mxu0 %v296
        %556 = vmatprep.subr.mxu0 %v302
        %557 = vmatpush1.msra.mxu0 %v301
        %558 = vmatprep.subr.mxu0 %v307
        %559 = vmatpush1.msra.mxu0 %v306
        %560 = vmatprep.subr.mxu0 0.0
        %561 = vmatpush1.msra.mxu0 0.0
        %562 = vmatprep.subr.mxu0 0.0
        %563 = vmatpush1.msra.mxu0 0.0
        %564 = vmatprep.subr.mxu0 0.0
        %565 = vmatpush1.msra.mxu0 0.0
        %566 = vmatprep.subr.mxu0 0.0
        %567 = vmatpush1.msra.mxu0 0.0
        %568 = vmatprep.subr.mxu0 0.0
        %569 = vmatpush1.msra.mxu0 0.0
        %570 = vmatprep.subr.mxu0 0.0
        %571 = vmatpush1.msra.mxu0 0.0
        %572 = vmatprep.subr.mxu0 0.0
        %573 = vmatpush1.msra.mxu0 0.0
        %574 = vmatprep.subr.mxu0 0.0
        %575 = vmatpush1.msra.mxu0 0.0
        %576 = vmatprep.subr.mxu0 0.0
        %577 = vmatpush1.msra.mxu0 0.0
        %578 = vmatprep.subr.mxu0 0.0
        %579 = vmatpush1.msra.mxu0 0.0
        %580 = vmatprep.subr.mxu0 0.0
        %581 = vmatpush1.msra.mxu0 0.0
        %582 = vmatprep.subr.mxu0 0.0
        %583 = vmatpush1.msra.mxu0 0.0
        %584 = vmatprep.subr.mxu0 0.0
        %585 = vmatpush1.msra.mxu0 0.0
        %586 = vmatprep.subr.mxu0 0.0
        %587 = vmatpush1.msra.mxu0 0.0
        %588 = vmatprep.subr.mxu0 0.0
        %589 = vmatpush1.msra.mxu0 0.0
        %590 = vmatprep.subr.mxu0 0.0
        %591 = vmatpush1.msra.mxu0 0.0
        %592 = vmatprep.subr.mxu0 0.0
        %593 = vmatpush1.msra.mxu0 0.0
        %594 = vmatprep.subr.mxu0 0.0
        %595 = vmatpush1.msra.mxu0 0.0
        %596 = vmatprep.subr.mxu0 0.0
        %597 = vmatpush1.msra.mxu0 0.0
        %598 = vmatprep.subr.mxu0 0.0
        %599 = vmatpush1.msra.mxu0 0.0
        %600 = vmatprep.subr.mxu0 0.0
        %601 = vmatpush1.msra.mxu0 0.0
        %602 = vmatprep.subr.mxu0 0.0
        %603 = vmatpush1.msra.mxu0 0.0
        %604 = vmatprep.subr.mxu0 0.0
        %605 = vmatpush1.msra.mxu0 0.0
        %606 = vmatprep.subr.mxu0 0.0
        %607 = vmatpush1.msra.mxu0 0.0
        %608 = vmatprep.subr.mxu0 0.0
        %609 = vmatpush1.msra.mxu0 0.0
        %610 = vmatprep.subr.mxu0 0.0
        %611 = vmatpush1.msra.mxu0 0.0
        %612 = vmatprep.subr.mxu0 0.0
        %613 = vmatpush1.msra.mxu0 0.0
        %614 = vmatprep.subr.mxu0 0.0
        %615 = vmatpush1.msra.mxu0 0.0
        %616 = vmatprep.mubr.f32.mxu0 0.0
        %617 = vmatmul.mubr.f32.gmra.mrb[0].mxu0 %v470
        %v618 = vpop.f32.mrb[0].mxu0
        %v619 = vadd.f32 %v459, %v618
        %v620 = vpop.f32.mrb[0].mxu0
        %v621 = vadd.f32 %v463, %v620
        %622 = vmatprep.mubr.f32.mxu0 0.0
        %623 = vmatmul.mubr.f32.gmra.mrb[0].mxu0 %v473
        %v624 = vpop.f32.mrb[0].mxu0
        %v625 = vadd.f32 %v459, %v624
        %v626 = vpop.f32.mrb[0].mxu0
        %v627 = vadd.f32 %v463, %v626
        %628 = vdwg.mxu0
        %629 = vmatprep.subr.mxu0 0.0
        %630 = vmatpush1.msra.mxu0 %v293
        %631 = vmatprep.subr.mxu0 0.0
        %632 = vmatpush1.msra.mxu0 %v298
        %633 = vmatprep.subr.mxu0 0.0
        %634 = vmatpush1.msra.mxu0 %v303
        %635 = vmatprep.subr.mxu0 0.0
        %636 = vmatpush1.msra.mxu0 %v308
        %637 = vmatprep.subr.mxu0 0.0
        %638 = vmatpush1.msra.mxu0 0.0
        %639 = vmatprep.subr.mxu0 0.0
        %640 = vmatpush1.msra.mxu0 0.0
        %641 = vmatprep.subr.mxu0 0.0
        %642 = vmatpush1.msra.mxu0 0.0
        %643 = vmatprep.subr.mxu0 0.0
        %644 = vmatpush1.msra.mxu0 0.0
        %645 = vmatprep.subr.mxu0 0.0
        %646 = vmatpush1.msra.mxu0 0.0
        %647 = vmatprep.subr.mxu0 0.0
        %648 = vmatpush1.msra.mxu0 0.0
        %649 = vmatprep.subr.mxu0 0.0
        %650 = vmatpush1.msra.mxu0 0.0
        %651 = vmatprep.subr.mxu0 0.0
        %652 = vmatpush1.msra.mxu0 0.0
        %653 = vmatprep.subr.mxu0 0.0
        %654 = vmatpush1.msra.mxu0 0.0
        %655 = vmatprep.subr.mxu0 0.0
        %656 = vmatpush1.msra.mxu0 0.0
        %657 = vmatprep.subr.mxu0 0.0
        %658 = vmatpush1.msra.mxu0 0.0
        %659 = vmatprep.subr.mxu0 0.0
        %660 = vmatpush1.msra.mxu0 0.0
        %661 = vmatprep.subr.mxu0 0.0
        %662 = vmatpush1.msra.mxu0 0.0
        %663 = vmatprep.subr.mxu0 0.0
        %664 = vmatpush1.msra.mxu0 0.0
        %665 = vmatprep.subr.mxu0 0.0
        %666 = vmatpush1.msra.mxu0 0.0
        %667 = vmatprep.subr.mxu0 0.0
        %668 = vmatpush1.msra.mxu0 0.0
        %669 = vmatprep.subr.mxu0 0.0
        %670 = vmatpush1.msra.mxu0 0.0
        %671 = vmatprep.subr.mxu0 0.0
        %672 = vmatpush1.msra.mxu0 0.0
        %673 = vmatprep.subr.mxu0 0.0
        %674 = vmatpush1.msra.mxu0 0.0
        %675 = vmatprep.subr.mxu0 0.0
        %676 = vmatpush1.msra.mxu0 0.0
        %677 = vmatprep.subr.mxu0 0.0
        %678 = vmatpush1.msra.mxu0 0.0
        %679 = vmatprep.subr.mxu0 0.0
        %680 = vmatpush1.msra.mxu0 0.0
        %681 = vmatprep.subr.mxu0 0.0
        %682 = vmatpush1.msra.mxu0 0.0
        %683 = vmatprep.subr.mxu0 0.0
        %684 = vmatpush1.msra.mxu0 0.0
        %685 = vmatprep.subr.mxu0 0.0
        %686 = vmatpush1.msra.mxu0 0.0
        %687 = vmatprep.subr.mxu0 0.0
        %688 = vmatpush1.msra.mxu0 0.0
        %689 = vmatprep.subr.mxu0 0.0
        %690 = vmatpush1.msra.mxu0 0.0
        %691 = vmatprep.subr.mxu0 0.0
        %692 = vmatpush1.msra.mxu0 0.0
        %693 = vmatprep.mubr.f32.mxu0 0.0
        %694 = vmatmul.mubr.f32.gmra.mrb[0].mxu0 %v470
        %v695 = vpop.f32.mrb[0].mxu0
        %v696 = vadd.f32 %v467, %v695
        %v697 = vpop.f32.mrb[0].mxu0
        %698 = vmatprep.mubr.f32.mxu0 0.0
        %699 = vmatmul.mubr.f32.gmra.mrb[0].mxu0 %v473
        %v700 = vpop.f32.mrb[0].mxu0
        %v701 = vadd.f32 %v467, %v700
        %v702 = vpop.f32.mrb[0].mxu0
        %703 = vdwg.mxu0
        %v705 = vsel %vm364, %v346, 0
        %v708 = vsel %vm364, %v347, 0
        %v711 = vsel %vm364, %v348, 0
        %v714 = vsel %vm364, %v349, 0
        %v717 = vsel %vm364, %v350, 0
        %v720 = vsel %vm364, %v351, 0
        %v723 = vsel %vm364, %v352, 0
        %v726 = vsel %vm364, %v353, 0
        %v729 = vsel %vm364, %v354, 0
        %v732 = vsel %vm364, %v355, 0
        %734 = vmatprep.subr.mxu0 %v621
        %735 = vmatpush1.msra.mxu0 %v619
        %736 = vmatprep.subr.mxu0 %v627
        %737 = vmatpush1.msra.mxu0 %v625
        %738 = vmatprep.subr.mxu0 0.0
        %739 = vmatpush1.msra.mxu0 0.0
        %740 = vmatprep.subr.mxu0 0.0
        %741 = vmatpush1.msra.mxu0 0.0
        %742 = vmatprep.subr.mxu0 0.0
        %743 = vmatpush1.msra.mxu0 0.0
        %744 = vmatprep.subr.mxu0 0.0
        %745 = vmatpush1.msra.mxu0 0.0
        %746 = vmatprep.subr.mxu0 0.0
        %747 = vmatpush1.msra.mxu0 0.0
        %748 = vmatprep.subr.mxu0 0.0
        %749 = vmatpush1.msra.mxu0 0.0
        %750 = vmatprep.subr.mxu0 0.0
        %751 = vmatpush1.msra.mxu0 0.0
        %752 = vmatprep.subr.mxu0 0.0
        %753 = vmatpush1.msra.mxu0 0.0
        %754 = vmatprep.subr.mxu0 0.0
        %755 = vmatpush1.msra.mxu0 0.0
        %756 = vmatprep.subr.mxu0 0.0
        %757 = vmatpush1.msra.mxu0 0.0
        %758 = vmatprep.subr.mxu0 0.0
        %759 = vmatpush1.msra.mxu0 0.0
        %760 = vmatprep.subr.mxu0 0.0
        %761 = vmatpush1.msra.mxu0 0.0
        %762 = vmatprep.subr.mxu0 0.0
        %763 = vmatpush1.msra.mxu0 0.0
        %764 = vmatprep.subr.mxu0 0.0
        %765 = vmatpush1.msra.mxu0 0.0
        %766 = vmatprep.subr.mxu0 0.0
        %767 = vmatpush1.msra.mxu0 0.0
        %768 = vmatprep.subr.mxu0 0.0
        %769 = vmatpush1.msra.mxu0 0.0
        %770 = vmatprep.subr.mxu0 0.0
        %771 = vmatpush1.msra.mxu0 0.0
        %772 = vmatprep.subr.mxu0 0.0
        %773 = vmatpush1.msra.mxu0 0.0
        %774 = vmatprep.subr.mxu0 0.0
        %775 = vmatpush1.msra.mxu0 0.0
        %776 = vmatprep.subr.mxu0 0.0
        %777 = vmatpush1.msra.mxu0 0.0
        %778 = vmatprep.subr.mxu0 0.0
        %779 = vmatpush1.msra.mxu0 0.0
        %780 = vmatprep.subr.mxu0 0.0
        %781 = vmatpush1.msra.mxu0 0.0
        %782 = vmatprep.subr.mxu0 0.0
        %783 = vmatpush1.msra.mxu0 0.0
        %784 = vmatprep.subr.mxu0 0.0
        %785 = vmatpush1.msra.mxu0 0.0
        %786 = vmatprep.subr.mxu0 0.0
        %787 = vmatpush1.msra.mxu0 0.0
        %788 = vmatprep.subr.mxu0 0.0
        %789 = vmatpush1.msra.mxu0 0.0
        %790 = vmatprep.subr.mxu0 0.0
        %791 = vmatpush1.msra.mxu0 0.0
        %792 = vmatprep.subr.mxu0 0.0
        %793 = vmatpush1.msra.mxu0 0.0
        %794 = vmatprep.subr.mxu0 0.0
        %795 = vmatpush1.msra.mxu0 0.0
        %796 = vmatprep.subr.mxu0 0.0
        %797 = vmatpush1.msra.mxu0 0.0
        %798 = vmatprep.mubr.f32.mxu0 0.0
        %799 = vmatmul.mubr.f32.gmra.mrb[0].mxu0 %v705
        %v800 = vpop.f32.mrb[0].mxu0
        %v801 = vadd.f32 0.0, %v800
        %v802 = vpop.f32.mrb[0].mxu0
        %v803 = vadd.f32 0.0, %v802
        %804 = vmatprep.mubr.f32.mxu0 0.0
        %805 = vmatmul.mubr.f32.gmra.mrb[0].mxu0 %v708
        %v806 = vpop.f32.mrb[0].mxu0
        %v807 = vadd.f32 0.0, %v806
        %v808 = vpop.f32.mrb[0].mxu0
        %v809 = vadd.f32 0.0, %v808
        %810 = vmatprep.mubr.f32.mxu0 0.0
        %811 = vmatmul.mubr.f32.gmra.mrb[0].mxu0 %v711
        %v812 = vpop.f32.mrb[0].mxu0
        %v813 = vadd.f32 0.0, %v812
        %v814 = vpop.f32.mrb[0].mxu0
        %v815 = vadd.f32 0.0, %v814
        %816 = vmatprep.mubr.f32.mxu0 0.0
        %817 = vmatmul.mubr.f32.gmra.mrb[0].mxu0 %v714
        %v818 = vpop.f32.mrb[0].mxu0
        %v819 = vadd.f32 0.0, %v818
        %v820 = vpop.f32.mrb[0].mxu0
        %v821 = vadd.f32 0.0, %v820
        %822 = vmatprep.mubr.f32.mxu0 0.0
        %823 = vmatmul.mubr.f32.gmra.mrb[0].mxu0 %v717
        %v824 = vpop.f32.mrb[0].mxu0
        %v825 = vadd.f32 0.0, %v824
        %v826 = vpop.f32.mrb[0].mxu0
        %v827 = vadd.f32 0.0, %v826
        %828 = vmatprep.mubr.f32.mxu0 0.0
        %829 = vmatmul.mubr.f32.gmra.mrb[0].mxu0 %v720
        %v830 = vpop.f32.mrb[0].mxu0
        %v831 = vadd.f32 0.0, %v830
        %v832 = vpop.f32.mrb[0].mxu0
        %v833 = vadd.f32 0.0, %v832
        %834 = vmatprep.mubr.f32.mxu0 0.0
        %835 = vmatmul.mubr.f32.gmra.mrb[0].mxu0 %v723
        %v836 = vpop.f32.mrb[0].mxu0
        %v837 = vadd.f32 0.0, %v836
        %v838 = vpop.f32.mrb[0].mxu0
        %v839 = vadd.f32 0.0, %v838
        %840 = vmatprep.mubr.f32.mxu0 0.0
        %841 = vmatmul.mubr.f32.gmra.mrb[0].mxu0 %v726
        %v842 = vpop.f32.mrb[0].mxu0
        %v843 = vadd.f32 0.0, %v842
        %v844 = vpop.f32.mrb[0].mxu0
        %v845 = vadd.f32 0.0, %v844
        %846 = vmatprep.mubr.f32.mxu0 0.0
        %847 = vmatmul.mubr.f32.gmra.mrb[0].mxu0 %v729
        %v848 = vpop.f32.mrb[0].mxu0
        %v849 = vadd.f32 0.0, %v848
        %v850 = vpop.f32.mrb[0].mxu0
        %v851 = vadd.f32 0.0, %v850
        %852 = vmatprep.mubr.f32.mxu0 0.0
        %853 = vmatmul.mubr.f32.gmra.mrb[0].mxu0 %v732
        %v854 = vpop.f32.mrb[0].mxu0
        %v855 = vadd.f32 0.0, %v854
        %v856 = vpop.f32.mrb[0].mxu0
        %v857 = vadd.f32 0.0, %v856
        %858 = vdwg.mxu0
        %v859 = vlaneseq
        %v860 = vand.u32 %v859, 127
        %v861 = vadd.s32 %v860, 128
        %vm862 = vcmp.lt.s32.totalorder %v860, 0
        %v863 = vsub.s32 0, %v860
        %v864 = vsel %vm862, %v863, %v860
        %v865 = vshrl.u32 %v864, 6
        %v866 = vand.u32 %v864, 63
        %v867 = vsub.s32 0, %v866
        %v868 = vsel %vm862, %v867, %v866
        %vm869 = vcmp.lt.s32.totalorder %v861, 0
        %v870 = vsub.s32 0, %v861
        %v871 = vsel %vm869, %v870, %v861
        %v872 = vshrl.u32 %v871, 6
        %v873 = vand.u32 %v871, 63
        %v874 = vsub.s32 0, %v873
        %v875 = vsel %vm869, %v874, %v873
        %vm876 = vcmp.ne.s32.totalorder %v868, 0
        %vm877 = vcmp.ne.s32.totalorder %v875, 0
        %vm878 = vcmp.lt.s32.totalorder %v868, 0
        %vm879 = vcmp.lt.s32.totalorder %v875, 0
        %vm880 = vmand %vm878, %vm876
        %vm881 = vmand %vm879, %vm877
        %v882 = vadd.s32 %v868, 64
        %v883 = vadd.s32 %v875, 64
        %v884 = vsel %vm880, %v882, %v868
        %v885 = vsel %vm881, %v883, %v875
        %vm886 = vcmp.lt.s32.totalorder %v884, 32
        %vm887 = vcmp.lt.s32.totalorder %v885, 32
        %v888 = vsel %vm886, %v801, %v849
        %v889 = vsel %vm887, %v803, %v851
        %v890 = vsel %vm886, %v807, %v855
        %v891 = vsel %vm887, %v809, %v857
        %v892 = vadd.f32 %v542, %v888
        %v893 = vadd.f32 %v544, %v889
        %v894 = vadd.f32 %v548, %v890
        %v895 = vadd.f32 %v550, %v891
        %v896 = vlaneseq
        %v897 = vshrl.u32 %v896, 7
        %v898 = vsub.s32 2, %v897
        %v899 = vrot.slane %v341, %v898
        %v900 = vlaneseq
        %v901 = vshrl.u32 %v900, 7
        %v902 = vsub.s32 2, %v901
        %v903 = vrot.slane %v342, %v902
        %vm904 = vcmask 523264
        %v906 = vsel %vm904, 0.0, 0
        %908 = vmatprep.subr.mxu0 %v310
        %909 = vmatpush1.msra.mxu0 %v309
        %910 = vmatprep.subr.mxu0 %v312
        %911 = vmatpush1.msra.mxu0 %v311
        %912 = vmatprep.subr.mxu0 %v314
        %913 = vmatpush1.msra.mxu0 %v313
        %914 = vmatprep.subr.mxu0 %v316
        %915 = vmatpush1.msra.mxu0 %v315
        %916 = vmatprep.subr.mxu0 %v318
        %917 = vmatpush1.msra.mxu0 %v317
        %918 = vmatprep.subr.mxu0 %v320
        %919 = vmatpush1.msra.mxu0 %v319
        %920 = vmatprep.subr.mxu0 %v322
        %921 = vmatpush1.msra.mxu0 %v321
        %922 = vmatprep.subr.mxu0 %v324
        %923 = vmatpush1.msra.mxu0 %v323
        %924 = vmatprep.subr.mxu0 0.0
        %925 = vmatpush1.msra.mxu0 0.0
        %926 = vmatprep.subr.mxu0 0.0
        %927 = vmatpush1.msra.mxu0 0.0
        %928 = vmatprep.subr.mxu0 0.0
        %929 = vmatpush1.msra.mxu0 0.0
        %930 = vmatprep.subr.mxu0 0.0
        %931 = vmatpush1.msra.mxu0 0.0
        %932 = vmatprep.subr.mxu0 0.0
        %933 = vmatpush1.msra.mxu0 0.0
        %934 = vmatprep.subr.mxu0 0.0
        %935 = vmatpush1.msra.mxu0 0.0
        %936 = vmatprep.subr.mxu0 0.0
        %937 = vmatpush1.msra.mxu0 0.0
        %938 = vmatprep.subr.mxu0 0.0
        %939 = vmatpush1.msra.mxu0 0.0
        %940 = vmatprep.subr.mxu0 0.0
        %941 = vmatpush1.msra.mxu0 0.0
        %942 = vmatprep.subr.mxu0 0.0
        %943 = vmatpush1.msra.mxu0 0.0
        %944 = vmatprep.subr.mxu0 0.0
        %945 = vmatpush1.msra.mxu0 0.0
        %946 = vmatprep.subr.mxu0 0.0
        %947 = vmatpush1.msra.mxu0 0.0
        %948 = vmatprep.subr.mxu0 0.0
        %949 = vmatpush1.msra.mxu0 0.0
        %950 = vmatprep.subr.mxu0 0.0
        %951 = vmatpush1.msra.mxu0 0.0
        %952 = vmatprep.subr.mxu0 0.0
        %953 = vmatpush1.msra.mxu0 0.0
        %954 = vmatprep.subr.mxu0 0.0
        %955 = vmatpush1.msra.mxu0 0.0
        %956 = vmatprep.subr.mxu0 0.0
        %957 = vmatpush1.msra.mxu0 0.0
        %958 = vmatprep.subr.mxu0 0.0
        %959 = vmatpush1.msra.mxu0 0.0
        %960 = vmatprep.subr.mxu0 0.0
        %961 = vmatpush1.msra.mxu0 0.0
        %962 = vmatprep.subr.mxu0 0.0
        %963 = vmatpush1.msra.mxu0 0.0
        %964 = vmatprep.subr.mxu0 0.0
        %965 = vmatpush1.msra.mxu0 0.0
        %966 = vmatprep.subr.mxu0 0.0
        %967 = vmatpush1.msra.mxu0 0.0
        %968 = vmatprep.subr.mxu0 0.0
        %969 = vmatpush1.msra.mxu0 0.0
        %970 = vmatprep.subr.mxu0 0.0
        %971 = vmatpush1.msra.mxu0 0.0
        %972 = vmatprep.mubr.f32.mxu0 0.0
        %973 = vmatmul.mubr.f32.gmra.mrb[0].mxu0 %v906
        %v974 = vpop.f32.mrb[0].mxu0
        %v975 = vadd.f32 %v899, %v974
        %v976 = vpop.f32.mrb[0].mxu0
        %v977 = vadd.f32 %v903, %v976
        %978 = vmatprep.mubr.f32.mxu0 0.0
        %979 = vmatmul.mubr.f32.gmra.mrb[0].mxu0 %v906
        %v980 = vpop.f32.mrb[0].mxu0
        %v981 = vadd.f32 %v899, %v980
        %v982 = vpop.f32.mrb[0].mxu0
        %v983 = vadd.f32 %v903, %v982
        %984 = vdwg.mxu0
        %v985 = vadd.f32 %v892, %v975
        %v986 = vadd.f32 %v894, %v981
        %v987 = vxor.u32 %v985, 2147483648
        %v988 = vxor.u32 %v986, 2147483648
        %v989 = vmul.f32 %v987, 1.442695
        %v990 = vpow.pop %v989
        %v991 = vmul.f32 %v988, 1.442695
        %v992 = vpow.pop %v991
        %v993 = vadd.f32 %v990, 1.0
        %v994 = vadd.f32 %v992, 1.0
        %v995 = vrcp.pop %v993
        %v996 = vmul.f32 1.0, %v995
        %v997 = vrcp.pop %v994
        %v998 = vmul.f32 1.0, %v997
        %v999 = vmul.f32 %v996, %v977
        %v1000 = vmul.f32 %v998, %v983
        %v1001 = vadd.f32 %v893, %v999
        %v1002 = vadd.f32 %v895, %v1000
        %v1003 = vtanh.pop %v1001
        %v1004 = vtanh.pop %v1002
        %v1005 = vsub.f32 1.0, %v996
        %v1006 = vsub.f32 1.0, %v998
        %1009 = vrot.lane.b32.xlu0 %v1003, 64
        %v1010 = vpop.permute.xlu0 %1009
        %1011 = vrot.lane.b32.xlu0 %v1004, 64
        %v1012 = vpop.permute.xlu0 %1011
        %v1015 = vmul.f32 %v1005, %v1010
        %v1016 = vmul.f32 %v1006, %v1012
        %v1017 = vmul.f32 %v996, 0.0
        %v1018 = vmul.f32 %v998, 0.0
        %v1019 = vadd.f32 %v1015, %v1017
        %v1020 = vadd.f32 %v1016, %v1018
        %v1021 = vsel %vm886, %v813, %v837
        %v1022 = vsel %vm887, %v815, %v839
        %v1023 = vsel %vm886, %v819, %v843
        %v1024 = vsel %vm887, %v821, %v845
        %v1025 = vadd.f32 %v542, %v1021
        %v1026 = vadd.f32 %v544, %v1022
        %v1027 = vadd.f32 %v548, %v1023
        %v1028 = vadd.f32 %v550, %v1024
        %1031 = vrot.lane.b32.xlu0 %v1019, 64
        %v1032 = vpop.permute.xlu0 %1031
        %1033 = vrot.lane.b32.xlu0 %v1020, 64
        %v1034 = vpop.permute.xlu0 %1033
        %v1035 = vsel %vm904, %v1032, 0
        %v1037 = vsel %vm904, %v1034, 0
        %1039 = vmatprep.subr.mxu0 %v310
        %1040 = vmatpush1.msra.mxu0 %v309
        %1041 = vmatprep.subr.mxu0 %v312
        %1042 = vmatpush1.msra.mxu0 %v311
        %1043 = vmatprep.subr.mxu0 %v314
        %1044 = vmatpush1.msra.mxu0 %v313
        %1045 = vmatprep.subr.mxu0 %v316
        %1046 = vmatpush1.msra.mxu0 %v315
        %1047 = vmatprep.subr.mxu0 %v318
        %1048 = vmatpush1.msra.mxu0 %v317
        %1049 = vmatprep.subr.mxu0 %v320
        %1050 = vmatpush1.msra.mxu0 %v319
        %1051 = vmatprep.subr.mxu0 %v322
        %1052 = vmatpush1.msra.mxu0 %v321
        %1053 = vmatprep.subr.mxu0 %v324
        %1054 = vmatpush1.msra.mxu0 %v323
        %1055 = vmatprep.subr.mxu0 0.0
        %1056 = vmatpush1.msra.mxu0 0.0
        %1057 = vmatprep.subr.mxu0 0.0
        %1058 = vmatpush1.msra.mxu0 0.0
        %1059 = vmatprep.subr.mxu0 0.0
        %1060 = vmatpush1.msra.mxu0 0.0
        %1061 = vmatprep.subr.mxu0 0.0
        %1062 = vmatpush1.msra.mxu0 0.0
        %1063 = vmatprep.subr.mxu0 0.0
        %1064 = vmatpush1.msra.mxu0 0.0
        %1065 = vmatprep.subr.mxu0 0.0
        %1066 = vmatpush1.msra.mxu0 0.0
        %1067 = vmatprep.subr.mxu0 0.0
        %1068 = vmatpush1.msra.mxu0 0.0
        %1069 = vmatprep.subr.mxu0 0.0
        %1070 = vmatpush1.msra.mxu0 0.0
        %1071 = vmatprep.subr.mxu0 0.0
        %1072 = vmatpush1.msra.mxu0 0.0
        %1073 = vmatprep.subr.mxu0 0.0
        %1074 = vmatpush1.msra.mxu0 0.0
        %1075 = vmatprep.subr.mxu0 0.0
        %1076 = vmatpush1.msra.mxu0 0.0
        %1077 = vmatprep.subr.mxu0 0.0
        %1078 = vmatpush1.msra.mxu0 0.0
        %1079 = vmatprep.subr.mxu0 0.0
        %1080 = vmatpush1.msra.mxu0 0.0
        %1081 = vmatprep.subr.mxu0 0.0
        %1082 = vmatpush1.msra.mxu0 0.0
        %1083 = vmatprep.subr.mxu0 0.0
        %1084 = vmatpush1.msra.mxu0 0.0
        %1085 = vmatprep.subr.mxu0 0.0
        %1086 = vmatpush1.msra.mxu0 0.0
        %1087 = vmatprep.subr.mxu0 0.0
        %1088 = vmatpush1.msra.mxu0 0.0
        %1089 = vmatprep.subr.mxu0 0.0
        %1090 = vmatpush1.msra.mxu0 0.0
        %1091 = vmatprep.subr.mxu0 0.0
        %1092 = vmatpush1.msra.mxu0 0.0
        %1093 = vmatprep.subr.mxu0 0.0
        %1094 = vmatpush1.msra.mxu0 0.0
        %1095 = vmatprep.subr.mxu0 0.0
        %1096 = vmatpush1.msra.mxu0 0.0
        %1097 = vmatprep.subr.mxu0 0.0
        %1098 = vmatpush1.msra.mxu0 0.0
        %1099 = vmatprep.subr.mxu0 0.0
        %1100 = vmatpush1.msra.mxu0 0.0
        %1101 = vmatprep.subr.mxu0 0.0
        %1102 = vmatpush1.msra.mxu0 0.0
        %1103 = vmatprep.mubr.f32.mxu0 0.0
        %1104 = vmatmul.mubr.f32.gmra.mrb[0].mxu0 %v1035
        %v1105 = vpop.f32.mrb[0].mxu0
        %v1106 = vadd.f32 %v899, %v1105
        %v1107 = vpop.f32.mrb[0].mxu0
        %v1108 = vadd.f32 %v903, %v1107
        %1109 = vmatprep.mubr.f32.mxu0 0.0
        %1110 = vmatmul.mubr.f32.gmra.mrb[0].mxu0 %v1037
        %v1111 = vpop.f32.mrb[0].mxu0
        %v1112 = vadd.f32 %v899, %v1111
        %v1113 = vpop.f32.mrb[0].mxu0
        %v1114 = vadd.f32 %v903, %v1113
        %1115 = vdwg.mxu0
        %v1116 = vadd.f32 %v1025, %v1106
        %v1117 = vadd.f32 %v1027, %v1112
        %v1118 = vxor.u32 %v1116, 2147483648
        %v1119 = vxor.u32 %v1117, 2147483648
        %v1120 = vmul.f32 %v1118, 1.442695
        %v1121 = vpow.pop %v1120
        %v1122 = vmul.f32 %v1119, 1.442695
        %v1123 = vpow.pop %v1122
        %v1124 = vadd.f32 %v1121, 1.0
        %v1125 = vadd.f32 %v1123, 1.0
        %v1126 = vrcp.pop %v1124
        %v1127 = vmul.f32 1.0, %v1126
        %v1128 = vrcp.pop %v1125
        %v1129 = vmul.f32 1.0, %v1128
        %v1130 = vmul.f32 %v1127, %v1108
        %v1131 = vmul.f32 %v1129, %v1114
        %v1132 = vadd.f32 %v1026, %v1130
        %v1133 = vadd.f32 %v1028, %v1131
        %v1134 = vtanh.pop %v1132
        %v1135 = vtanh.pop %v1133
        %v1136 = vsub.f32 1.0, %v1127
        %v1137 = vsub.f32 1.0, %v1129
        %1140 = vrot.lane.b32.xlu0 %v1134, 64
        %v1141 = vpop.permute.xlu0 %1140
        %1142 = vrot.lane.b32.xlu0 %v1135, 64
        %v1143 = vpop.permute.xlu0 %1142
        %v1146 = vmul.f32 %v1136, %v1141
        %v1147 = vmul.f32 %v1137, %v1143
        %v1148 = vmul.f32 %v1127, %v1019
        %v1149 = vmul.f32 %v1129, %v1020
        %v1150 = vadd.f32 %v1146, %v1148
        %v1151 = vadd.f32 %v1147, %v1149
        %v1152 = vadd.f32 %v542, %v825
        %v1153 = vadd.f32 %v544, %v827
        %v1154 = vadd.f32 %v548, %v831
        %v1155 = vadd.f32 %v550, %v833
        %1158 = vrot.lane.b32.xlu0 %v1150, 64
        %v1159 = vpop.permute.xlu0 %1158
        %1160 = vrot.lane.b32.xlu0 %v1151, 64
        %v1161 = vpop.permute.xlu0 %1160
        %v1162 = vsel %vm904, %v1159, 0
        %v1164 = vsel %vm904, %v1161, 0
        %1166 = vmatprep.subr.mxu0 %v310
        %1167 = vmatpush1.msra.mxu0 %v309
        %1168 = vmatprep.subr.mxu0 %v312
        %1169 = vmatpush1.msra.mxu0 %v311
        %1170 = vmatprep.subr.mxu0 %v314
        %1171 = vmatpush1.msra.mxu0 %v313
        %1172 = vmatprep.subr.mxu0 %v316
        %1173 = vmatpush1.msra.mxu0 %v315
        %1174 = vmatprep.subr.mxu0 %v318
        %1175 = vmatpush1.msra.mxu0 %v317
        %1176 = vmatprep.subr.mxu0 %v320
        %1177 = vmatpush1.msra.mxu0 %v319
        %1178 = vmatprep.subr.mxu0 %v322
        %1179 = vmatpush1.msra.mxu0 %v321
        %1180 = vmatprep.subr.mxu0 %v324
        %1181 = vmatpush1.msra.mxu0 %v323
        %1182 = vmatprep.subr.mxu0 0.0
        %1183 = vmatpush1.msra.mxu0 0.0
        %1184 = vmatprep.subr.mxu0 0.0
        %1185 = vmatpush1.msra.mxu0 0.0
        %1186 = vmatprep.subr.mxu0 0.0
        %1187 = vmatpush1.msra.mxu0 0.0
        %1188 = vmatprep.subr.mxu0 0.0
        %1189 = vmatpush1.msra.mxu0 0.0
        %1190 = vmatprep.subr.mxu0 0.0
        %1191 = vmatpush1.msra.mxu0 0.0
        %1192 = vmatprep.subr.mxu0 0.0
        %1193 = vmatpush1.msra.mxu0 0.0
        %1194 = vmatprep.subr.mxu0 0.0
        %1195 = vmatpush1.msra.mxu0 0.0
        %1196 = vmatprep.subr.mxu0 0.0
        %1197 = vmatpush1.msra.mxu0 0.0
        %1198 = vmatprep.subr.mxu0 0.0
        %1199 = vmatpush1.msra.mxu0 0.0
        %1200 = vmatprep.subr.mxu0 0.0
        %1201 = vmatpush1.msra.mxu0 0.0
        %1202 = vmatprep.subr.mxu0 0.0
        %1203 = vmatpush1.msra.mxu0 0.0
        %1204 = vmatprep.subr.mxu0 0.0
        %1205 = vmatpush1.msra.mxu0 0.0
        %1206 = vmatprep.subr.mxu0 0.0
        %1207 = vmatpush1.msra.mxu0 0.0
        %1208 = vmatprep.subr.mxu0 0.0
        %1209 = vmatpush1.msra.mxu0 0.0
        %1210 = vmatprep.subr.mxu0 0.0
        %1211 = vmatpush1.msra.mxu0 0.0
        %1212 = vmatprep.subr.mxu0 0.0
        %1213 = vmatpush1.msra.mxu0 0.0
        %1214 = vmatprep.subr.mxu0 0.0
        %1215 = vmatpush1.msra.mxu0 0.0
        %1216 = vmatprep.subr.mxu0 0.0
        %1217 = vmatpush1.msra.mxu0 0.0
        %1218 = vmatprep.subr.mxu0 0.0
        %1219 = vmatpush1.msra.mxu0 0.0
        %1220 = vmatprep.subr.mxu0 0.0
        %1221 = vmatpush1.msra.mxu0 0.0
        %1222 = vmatprep.subr.mxu0 0.0
        %1223 = vmatpush1.msra.mxu0 0.0
        %1224 = vmatprep.subr.mxu0 0.0
        %1225 = vmatpush1.msra.mxu0 0.0
        %1226 = vmatprep.subr.mxu0 0.0
        %1227 = vmatpush1.msra.mxu0 0.0
        %1228 = vmatprep.subr.mxu0 0.0
        %1229 = vmatpush1.msra.mxu0 0.0
        %1230 = vmatprep.mubr.f32.mxu0 0.0
        %1231 = vmatmul.mubr.f32.gmra.mrb[0].mxu0 %v1162
        %v1232 = vpop.f32.mrb[0].mxu0
        %v1233 = vadd.f32 %v899, %v1232
        %v1234 = vpop.f32.mrb[0].mxu0
        %v1235 = vadd.f32 %v903, %v1234
        %1236 = vmatprep.mubr.f32.mxu0 0.0
        %1237 = vmatmul.mubr.f32.gmra.mrb[0].mxu0 %v1164
        %v1238 = vpop.f32.mrb[0].mxu0
        %v1239 = vadd.f32 %v899, %v1238
        %v1240 = vpop.f32.mrb[0].mxu0
        %v1241 = vadd.f32 %v903, %v1240
        %1242 = vdwg.mxu0
        %v1243 = vadd.f32 %v1152, %v1233
        %v1244 = vadd.f32 %v1154, %v1239
        %v1245 = vxor.u32 %v1243, 2147483648
        %v1246 = vxor.u32 %v1244, 2147483648
        %v1247 = vmul.f32 %v1245, 1.442695
        %v1248 = vpow.pop %v1247
        %v1249 = vmul.f32 %v1246, 1.442695
        %v1250 = vpow.pop %v1249
        %v1251 = vadd.f32 %v1248, 1.0
        %v1252 = vadd.f32 %v1250, 1.0
        %v1253 = vrcp.pop %v1251
        %v1254 = vmul.f32 1.0, %v1253
        %v1255 = vrcp.pop %v1252
        %v1256 = vmul.f32 1.0, %v1255
        %v1257 = vmul.f32 %v1254, %v1235
        %v1258 = vmul.f32 %v1256, %v1241
        %v1259 = vadd.f32 %v1153, %v1257
        %v1260 = vadd.f32 %v1155, %v1258
        %v1261 = vtanh.pop %v1259
        %v1262 = vtanh.pop %v1260
        %v1263 = vsub.f32 1.0, %v1254
        %v1264 = vsub.f32 1.0, %v1256
        %1267 = vrot.lane.b32.xlu0 %v1261, 64
        %v1268 = vpop.permute.xlu0 %1267
        %1269 = vrot.lane.b32.xlu0 %v1262, 64
        %v1270 = vpop.permute.xlu0 %1269
        %v1273 = vmul.f32 %v1263, %v1268
        %v1274 = vmul.f32 %v1264, %v1270
        %v1275 = vmul.f32 %v1254, %v1150
        %v1276 = vmul.f32 %v1256, %v1151
        %v1277 = vadd.f32 %v1273, %v1275
        %v1278 = vadd.f32 %v1274, %v1276
        %v1279 = vsel %vm886, %v837, %v813
        %v1280 = vsel %vm887, %v839, %v815
        %v1281 = vsel %vm886, %v843, %v819
        %v1282 = vsel %vm887, %v845, %v821
        %v1283 = vadd.f32 %v542, %v1279
        %v1284 = vadd.f32 %v544, %v1280
        %v1285 = vadd.f32 %v548, %v1281
        %v1286 = vadd.f32 %v550, %v1282
        %1289 = vrot.lane.b32.xlu0 %v1277, 64
        %v1290 = vpop.permute.xlu0 %1289
        %1291 = vrot.lane.b32.xlu0 %v1278, 64
        %v1292 = vpop.permute.xlu0 %1291
        %v1293 = vsel %vm904, %v1290, 0
        %v1295 = vsel %vm904, %v1292, 0
        %1297 = vmatprep.subr.mxu0 %v310
        %1298 = vmatpush1.msra.mxu0 %v309
        %1299 = vmatprep.subr.mxu0 %v312
        %1300 = vmatpush1.msra.mxu0 %v311
        %1301 = vmatprep.subr.mxu0 %v314
        %1302 = vmatpush1.msra.mxu0 %v313
        %1303 = vmatprep.subr.mxu0 %v316
        %1304 = vmatpush1.msra.mxu0 %v315
        %1305 = vmatprep.subr.mxu0 %v318
        %1306 = vmatpush1.msra.mxu0 %v317
        %1307 = vmatprep.subr.mxu0 %v320
        %1308 = vmatpush1.msra.mxu0 %v319
        %1309 = vmatprep.subr.mxu0 %v322
        %1310 = vmatpush1.msra.mxu0 %v321
        %1311 = vmatprep.subr.mxu0 %v324
        %1312 = vmatpush1.msra.mxu0 %v323
        %1313 = vmatprep.subr.mxu0 0.0
        %1314 = vmatpush1.msra.mxu0 0.0
        %1315 = vmatprep.subr.mxu0 0.0
        %1316 = vmatpush1.msra.mxu0 0.0
        %1317 = vmatprep.subr.mxu0 0.0
        %1318 = vmatpush1.msra.mxu0 0.0
        %1319 = vmatprep.subr.mxu0 0.0
        %1320 = vmatpush1.msra.mxu0 0.0
        %1321 = vmatprep.subr.mxu0 0.0
        %1322 = vmatpush1.msra.mxu0 0.0
        %1323 = vmatprep.subr.mxu0 0.0
        %1324 = vmatpush1.msra.mxu0 0.0
        %1325 = vmatprep.subr.mxu0 0.0
        %1326 = vmatpush1.msra.mxu0 0.0
        %1327 = vmatprep.subr.mxu0 0.0
        %1328 = vmatpush1.msra.mxu0 0.0
        %1329 = vmatprep.subr.mxu0 0.0
        %1330 = vmatpush1.msra.mxu0 0.0
        %1331 = vmatprep.subr.mxu0 0.0
        %1332 = vmatpush1.msra.mxu0 0.0
        %1333 = vmatprep.subr.mxu0 0.0
        %1334 = vmatpush1.msra.mxu0 0.0
        %1335 = vmatprep.subr.mxu0 0.0
        %1336 = vmatpush1.msra.mxu0 0.0
        %1337 = vmatprep.subr.mxu0 0.0
        %1338 = vmatpush1.msra.mxu0 0.0
        %1339 = vmatprep.subr.mxu0 0.0
        %1340 = vmatpush1.msra.mxu0 0.0
        %1341 = vmatprep.subr.mxu0 0.0
        %1342 = vmatpush1.msra.mxu0 0.0
        %1343 = vmatprep.subr.mxu0 0.0
        %1344 = vmatpush1.msra.mxu0 0.0
        %1345 = vmatprep.subr.mxu0 0.0
        %1346 = vmatpush1.msra.mxu0 0.0
        %1347 = vmatprep.subr.mxu0 0.0
        %1348 = vmatpush1.msra.mxu0 0.0
        %1349 = vmatprep.subr.mxu0 0.0
        %1350 = vmatpush1.msra.mxu0 0.0
        %1351 = vmatprep.subr.mxu0 0.0
        %1352 = vmatpush1.msra.mxu0 0.0
        %1353 = vmatprep.subr.mxu0 0.0
        %1354 = vmatpush1.msra.mxu0 0.0
        %1355 = vmatprep.subr.mxu0 0.0
        %1356 = vmatpush1.msra.mxu0 0.0
        %1357 = vmatprep.subr.mxu0 0.0
        %1358 = vmatpush1.msra.mxu0 0.0
        %1359 = vmatprep.subr.mxu0 0.0
        %1360 = vmatpush1.msra.mxu0 0.0
        %1361 = vmatprep.mubr.f32.mxu0 0.0
        %1362 = vmatmul.mubr.f32.gmra.mrb[0].mxu0 %v1293
        %v1363 = vpop.f32.mrb[0].mxu0
        %v1364 = vadd.f32 %v899, %v1363
        %v1365 = vpop.f32.mrb[0].mxu0
        %v1366 = vadd.f32 %v903, %v1365
        %1367 = vmatprep.mubr.f32.mxu0 0.0
        %1368 = vmatmul.mubr.f32.gmra.mrb[0].mxu0 %v1295
        %v1369 = vpop.f32.mrb[0].mxu0
        %v1370 = vadd.f32 %v899, %v1369
        %v1371 = vpop.f32.mrb[0].mxu0
        %v1372 = vadd.f32 %v903, %v1371
        %1373 = vdwg.mxu0
        %v1374 = vadd.f32 %v1283, %v1364
        %v1375 = vadd.f32 %v1285, %v1370
        %v1376 = vxor.u32 %v1374, 2147483648
        %v1377 = vxor.u32 %v1375, 2147483648
        %v1378 = vmul.f32 %v1376, 1.442695
        %v1379 = vpow.pop %v1378
        %v1380 = vmul.f32 %v1377, 1.442695
        %v1381 = vpow.pop %v1380
        %v1382 = vadd.f32 %v1379, 1.0
        %v1383 = vadd.f32 %v1381, 1.0
        %v1384 = vrcp.pop %v1382
        %v1385 = vmul.f32 1.0, %v1384
        %v1386 = vrcp.pop %v1383
        %v1387 = vmul.f32 1.0, %v1386
        %v1388 = vmul.f32 %v1385, %v1366
        %v1389 = vmul.f32 %v1387, %v1372
        %v1390 = vadd.f32 %v1284, %v1388
        %v1391 = vadd.f32 %v1286, %v1389
        %v1392 = vtanh.pop %v1390
        %v1393 = vtanh.pop %v1391
        %v1394 = vsub.f32 1.0, %v1385
        %v1395 = vsub.f32 1.0, %v1387
        %1398 = vrot.lane.b32.xlu0 %v1392, 64
        %v1399 = vpop.permute.xlu0 %1398
        %1400 = vrot.lane.b32.xlu0 %v1393, 64
        %v1401 = vpop.permute.xlu0 %1400
        %v1404 = vmul.f32 %v1394, %v1399
        %v1405 = vmul.f32 %v1395, %v1401
        %v1406 = vmul.f32 %v1385, %v1277
        %v1407 = vmul.f32 %v1387, %v1278
        %v1408 = vadd.f32 %v1404, %v1406
        %v1409 = vadd.f32 %v1405, %v1407
        %v1410 = vsel %vm886, %v849, %v801
        %v1411 = vsel %vm887, %v851, %v803
        %v1412 = vsel %vm886, %v855, %v807
        %v1413 = vsel %vm887, %v857, %v809
        %v1414 = vadd.f32 %v542, %v1410
        %v1415 = vadd.f32 %v544, %v1411
        %v1416 = vadd.f32 %v548, %v1412
        %v1417 = vadd.f32 %v550, %v1413
        %1420 = vrot.lane.b32.xlu0 %v1408, 64
        %v1421 = vpop.permute.xlu0 %1420
        %1422 = vrot.lane.b32.xlu0 %v1409, 64
        %v1423 = vpop.permute.xlu0 %1422
        %v1424 = vsel %vm904, %v1421, 0
        %v1426 = vsel %vm904, %v1423, 0
        %1428 = vmatprep.subr.mxu0 %v310
        %1429 = vmatpush1.msra.mxu0 %v309
        %1430 = vmatprep.subr.mxu0 %v312
        %1431 = vmatpush1.msra.mxu0 %v311
        %1432 = vmatprep.subr.mxu0 %v314
        %1433 = vmatpush1.msra.mxu0 %v313
        %1434 = vmatprep.subr.mxu0 %v316
        %1435 = vmatpush1.msra.mxu0 %v315
        %1436 = vmatprep.subr.mxu0 %v318
        %1437 = vmatpush1.msra.mxu0 %v317
        %1438 = vmatprep.subr.mxu0 %v320
        %1439 = vmatpush1.msra.mxu0 %v319
        %1440 = vmatprep.subr.mxu0 %v322
        %1441 = vmatpush1.msra.mxu0 %v321
        %1442 = vmatprep.subr.mxu0 %v324
        %1443 = vmatpush1.msra.mxu0 %v323
        %1444 = vmatprep.subr.mxu0 0.0
        %1445 = vmatpush1.msra.mxu0 0.0
        %1446 = vmatprep.subr.mxu0 0.0
        %1447 = vmatpush1.msra.mxu0 0.0
        %1448 = vmatprep.subr.mxu0 0.0
        %1449 = vmatpush1.msra.mxu0 0.0
        %1450 = vmatprep.subr.mxu0 0.0
        %1451 = vmatpush1.msra.mxu0 0.0
        %1452 = vmatprep.subr.mxu0 0.0
        %1453 = vmatpush1.msra.mxu0 0.0
        %1454 = vmatprep.subr.mxu0 0.0
        %1455 = vmatpush1.msra.mxu0 0.0
        %1456 = vmatprep.subr.mxu0 0.0
        %1457 = vmatpush1.msra.mxu0 0.0
        %1458 = vmatprep.subr.mxu0 0.0
        %1459 = vmatpush1.msra.mxu0 0.0
        %1460 = vmatprep.subr.mxu0 0.0
        %1461 = vmatpush1.msra.mxu0 0.0
        %1462 = vmatprep.subr.mxu0 0.0
        %1463 = vmatpush1.msra.mxu0 0.0
        %1464 = vmatprep.subr.mxu0 0.0
        %1465 = vmatpush1.msra.mxu0 0.0
        %1466 = vmatprep.subr.mxu0 0.0
        %1467 = vmatpush1.msra.mxu0 0.0
        %1468 = vmatprep.subr.mxu0 0.0
        %1469 = vmatpush1.msra.mxu0 0.0
        %1470 = vmatprep.subr.mxu0 0.0
        %1471 = vmatpush1.msra.mxu0 0.0
        %1472 = vmatprep.subr.mxu0 0.0
        %1473 = vmatpush1.msra.mxu0 0.0
        %1474 = vmatprep.subr.mxu0 0.0
        %1475 = vmatpush1.msra.mxu0 0.0
        %1476 = vmatprep.subr.mxu0 0.0
        %1477 = vmatpush1.msra.mxu0 0.0
        %1478 = vmatprep.subr.mxu0 0.0
        %1479 = vmatpush1.msra.mxu0 0.0
        %1480 = vmatprep.subr.mxu0 0.0
        %1481 = vmatpush1.msra.mxu0 0.0
        %1482 = vmatprep.subr.mxu0 0.0
        %1483 = vmatpush1.msra.mxu0 0.0
        %1484 = vmatprep.subr.mxu0 0.0
        %1485 = vmatpush1.msra.mxu0 0.0
        %1486 = vmatprep.subr.mxu0 0.0
        %1487 = vmatpush1.msra.mxu0 0.0
        %1488 = vmatprep.subr.mxu0 0.0
        %1489 = vmatpush1.msra.mxu0 0.0
        %1490 = vmatprep.subr.mxu0 0.0
        %1491 = vmatpush1.msra.mxu0 0.0
        %1492 = vmatprep.mubr.f32.mxu0 0.0
        %1493 = vmatmul.mubr.f32.gmra.mrb[0].mxu0 %v1424
        %v1494 = vpop.f32.mrb[0].mxu0
        %v1495 = vadd.f32 %v899, %v1494
        %v1496 = vpop.f32.mrb[0].mxu0
        %v1497 = vadd.f32 %v903, %v1496
        %1498 = vmatprep.mubr.f32.mxu0 0.0
        %1499 = vmatmul.mubr.f32.gmra.mrb[0].mxu0 %v1426
        %v1500 = vpop.f32.mrb[0].mxu0
        %v1501 = vadd.f32 %v899, %v1500
        %v1502 = vpop.f32.mrb[0].mxu0
        %v1503 = vadd.f32 %v903, %v1502
        %1504 = vdwg.mxu0
        %v1505 = vadd.f32 %v1414, %v1495
        %v1506 = vadd.f32 %v1416, %v1501
        %v1507 = vxor.u32 %v1505, 2147483648
        %v1508 = vxor.u32 %v1506, 2147483648
        %v1509 = vmul.f32 %v1507, 1.442695
        %v1510 = vpow.pop %v1509
        %v1511 = vmul.f32 %v1508, 1.442695
        %v1512 = vpow.pop %v1511
        %v1513 = vadd.f32 %v1510, 1.0
        %v1514 = vadd.f32 %v1512, 1.0
        %v1515 = vrcp.pop %v1513
        %v1516 = vmul.f32 1.0, %v1515
        %v1517 = vrcp.pop %v1514
        %v1518 = vmul.f32 1.0, %v1517
        %v1519 = vmul.f32 %v1516, %v1497
        %v1520 = vmul.f32 %v1518, %v1503
        %v1521 = vadd.f32 %v1415, %v1519
        %v1522 = vadd.f32 %v1417, %v1520
        %v1523 = vtanh.pop %v1521
        %v1524 = vtanh.pop %v1522
        %v1525 = vsub.f32 1.0, %v1516
        %v1526 = vsub.f32 1.0, %v1518
        %1529 = vrot.lane.b32.xlu0 %v1523, 64
        %v1530 = vpop.permute.xlu0 %1529
        %1531 = vrot.lane.b32.xlu0 %v1524, 64
        %v1532 = vpop.permute.xlu0 %1531
        %v1535 = vmul.f32 %v1525, %v1530
        %v1536 = vmul.f32 %v1526, %v1532
        %v1537 = vmul.f32 %v1516, %v1408
        %v1538 = vmul.f32 %v1518, %v1409
        %v1539 = vadd.f32 %v1535, %v1537
        %v1540 = vadd.f32 %v1536, %v1538
        %v1541 = vlaneseq
        %v1542 = vshrl.u32 %v1541, 7
        %v1543 = vsub.s32 3, %v1542
        %v1544 = vrot.slane %v341, %v1543
        %1546 = vrot.lane.b32.xlu0 %v1544, 64
        %v1547 = vpop.permute.xlu0 %1546
        %v1549 = vmul.f32 %v1019, %v1547
        %v1550 = vmul.f32 %v1020, %v1547
        %1553 = vrot.lane.b32.xlu0 %v1549, 64
        %v1554 = vpop.permute.xlu0 %1553
        %1555 = vrot.lane.b32.xlu0 %v1550, 64
        %v1556 = vpop.permute.xlu0 %1555
        %v1559 = vsel %vm468, %v1554, 0.0
        %1560 = vadd.xlane.f32.xlu0 %v1559
        %v1561 = vpop.xlane.xlu0 %1560
        %v1562 = vsel %vm468, %v1556, 0.0
        %1563 = vadd.xlane.f32.xlu0 %v1562
        %v1564 = vpop.xlane.xlu0 %1563
        %v1565 = vmul.f32 %v1539, %v1547
        %v1566 = vmul.f32 %v1540, %v1547
        %1569 = vrot.lane.b32.xlu0 %v1565, 32
        %v1570 = vpop.permute.xlu0 %1569
        %1571 = vrot.lane.b32.xlu0 %v1566, 32
        %v1572 = vpop.permute.xlu0 %1571
        %v1575 = vsel %vm468, %v1570, 0.0
        %1576 = vadd.xlane.f32.xlu0 %v1575
        %v1577 = vpop.xlane.xlu0 %1576
        %v1578 = vsel %vm468, %v1572, 0.0
        %1579 = vadd.xlane.f32.xlu0 %v1578
        %v1580 = vpop.xlane.xlu0 %1579
        %v1581 = vadd.f32 %v1561, %v1577
        %v1582 = vadd.f32 %v1564, %v1580
        %v1583 = vadd.f32 %v1581, %v356
        %v1584 = vadd.f32 %v1582, %v357
        %v1585 = vmul.f32 %v1583, 100.0
        %v1586 = vmul.f32 %v1584, 100.0
        %v1587 = vxor.u32 %v1585, 2147483648
        %v1588 = vxor.u32 %v1586, 2147483648
        %v1589 = vmul.f32 %v1587, 1.442695
        %v1590 = vpow.pop %v1589
        %v1591 = vmul.f32 %v1588, 1.442695
        %v1592 = vpow.pop %v1591
        %v1593 = vadd.f32 %v1590, 1.0
        %v1594 = vadd.f32 %v1592, 1.0
        %v1595 = vrcp.pop %v1593
        %v1596 = vmul.f32 1.0, %v1595
        %v1597 = vrcp.pop %v1594
        %v1598 = vmul.f32 1.0, %v1597
        %1600 = vset.pattern.permute.xlu0 0
        %1601 = vperm.xlu0 %1600, %v1596
        %v1602 = vpop.permute.xlu0 %1601
        %1605 = vset.pattern.permute.xlu0 0
        %1606 = vperm.xlu0 %1605, %v1598
        %v1607 = vpop.permute.xlu0 %1606
        %v1609 = vmul.f32 %v1602, %v346
        %v1610 = vmul.f32 %v1607, %v347
        %v1611 = vadd.f32 %v1609, 0.0
        %v1612 = vadd.f32 %v1610, 0.0
        %v1613 = vadd.f32 %v346, 0.0
        %v1614 = vadd.f32 %v347, 0.0
        %v1615 = vmul.f32 %v1150, %v1547
        %v1616 = vmul.f32 %v1151, %v1547
        %1619 = vrot.lane.b32.xlu0 %v1615, 64
        %v1620 = vpop.permute.xlu0 %1619
        %1621 = vrot.lane.b32.xlu0 %v1616, 64
        %v1622 = vpop.permute.xlu0 %1621
        %v1625 = vsel %vm468, %v1620, 0.0
        %1626 = vadd.xlane.f32.xlu0 %v1625
        %v1627 = vpop.xlane.xlu0 %1626
        %v1628 = vsel %vm468, %v1622, 0.0
        %1629 = vadd.xlane.f32.xlu0 %v1628
        %v1630 = vpop.xlane.xlu0 %1629
        %v1631 = vmul.f32 %v1408, %v1547
        %v1632 = vmul.f32 %v1409, %v1547
        %1635 = vrot.lane.b32.xlu0 %v1631, 32
        %v1636 = vpop.permute.xlu0 %1635
        %1637 = vrot.lane.b32.xlu0 %v1632, 32
        %v1638 = vpop.permute.xlu0 %1637
        %v1641 = vsel %vm468, %v1636, 0.0
        %1642 = vadd.xlane.f32.xlu0 %v1641
        %v1643 = vpop.xlane.xlu0 %1642
        %v1644 = vsel %vm468, %v1638, 0.0
        %1645 = vadd.xlane.f32.xlu0 %v1644
        %v1646 = vpop.xlane.xlu0 %1645
        %v1647 = vadd.f32 %v1627, %v1643
        %v1648 = vadd.f32 %v1630, %v1646
        %v1649 = vadd.f32 %v1647, %v356
        %v1650 = vadd.f32 %v1648, %v357
        %v1651 = vmul.f32 %v1649, 100.0
        %v1652 = vmul.f32 %v1650, 100.0
        %v1653 = vxor.u32 %v1651, 2147483648
        %v1654 = vxor.u32 %v1652, 2147483648
        %v1655 = vmul.f32 %v1653, 1.442695
        %v1656 = vpow.pop %v1655
        %v1657 = vmul.f32 %v1654, 1.442695
        %v1658 = vpow.pop %v1657
        %v1659 = vadd.f32 %v1656, 1.0
        %v1660 = vadd.f32 %v1658, 1.0
        %v1661 = vrcp.pop %v1659
        %v1662 = vmul.f32 1.0, %v1661
        %v1663 = vrcp.pop %v1660
        %v1664 = vmul.f32 1.0, %v1663
        %1666 = vset.pattern.permute.xlu0 1
        %1667 = vperm.xlu0 %1666, %v1662
        %v1668 = vpop.permute.xlu0 %1667
        %1671 = vset.pattern.permute.xlu0 1
        %1672 = vperm.xlu0 %1671, %v1664
        %v1673 = vpop.permute.xlu0 %1672
        %v1675 = vmul.f32 %v1668, %v348
        %v1676 = vmul.f32 %v1673, %v349
        %v1677 = vadd.f32 %v1611, %v1675
        %v1678 = vadd.f32 %v1612, %v1676
        %v1679 = vadd.f32 %v1613, %v348
        %v1680 = vadd.f32 %v1614, %v349
        %v1681 = vmul.f32 %v1277, %v1547
        %v1682 = vmul.f32 %v1278, %v1547
        %1685 = vrot.lane.b32.xlu0 %v1681, 64
        %v1686 = vpop.permute.xlu0 %1685
        %1687 = vrot.lane.b32.xlu0 %v1682, 64
        %v1688 = vpop.permute.xlu0 %1687
        %v1691 = vsel %vm468, %v1686, 0.0
        %1692 = vadd.xlane.f32.xlu0 %v1691
        %v1693 = vpop.xlane.xlu0 %1692
        %v1694 = vsel %vm468, %v1688, 0.0
        %1695 = vadd.xlane.f32.xlu0 %v1694
        %v1696 = vpop.xlane.xlu0 %1695
        %1697 = vrot.lane.b32.xlu0 %v1681, 32
        %v1698 = vpop.permute.xlu0 %1697
        %1699 = vrot.lane.b32.xlu0 %v1682, 32
        %v1700 = vpop.permute.xlu0 %1699
        %v1703 = vsel %vm468, %v1698, 0.0
        %1704 = vadd.xlane.f32.xlu0 %v1703
        %v1705 = vpop.xlane.xlu0 %1704
        %v1706 = vsel %vm468, %v1700, 0.0
        %1707 = vadd.xlane.f32.xlu0 %v1706
        %v1708 = vpop.xlane.xlu0 %1707
        %v1709 = vadd.f32 %v1693, %v1705
        %v1710 = vadd.f32 %v1696, %v1708
        %v1711 = vadd.f32 %v1709, %v356
        %v1712 = vadd.f32 %v1710, %v357
        %v1713 = vmul.f32 %v1711, 100.0
        %v1714 = vmul.f32 %v1712, 100.0
        %v1715 = vxor.u32 %v1713, 2147483648
        %v1716 = vxor.u32 %v1714, 2147483648
        %v1717 = vmul.f32 %v1715, 1.442695
        %v1718 = vpow.pop %v1717
        %v1719 = vmul.f32 %v1716, 1.442695
        %v1720 = vpow.pop %v1719
        %v1721 = vadd.f32 %v1718, 1.0
        %v1722 = vadd.f32 %v1720, 1.0
        %v1723 = vrcp.pop %v1721
        %v1724 = vmul.f32 1.0, %v1723
        %v1725 = vrcp.pop %v1722
        %v1726 = vmul.f32 1.0, %v1725
        %1728 = vset.pattern.permute.xlu0 2
        %1729 = vperm.xlu0 %1728, %v1724
        %v1730 = vpop.permute.xlu0 %1729
        %1733 = vset.pattern.permute.xlu0 2
        %1734 = vperm.xlu0 %1733, %v1726
        %v1735 = vpop.permute.xlu0 %1734
        %v1737 = vmul.f32 %v1730, %v350
        %v1738 = vmul.f32 %v1735, %v351
        %v1739 = vadd.f32 %v1677, %v1737
        %v1740 = vadd.f32 %v1678, %v1738
        %v1741 = vadd.f32 %v1679, %v350
        %v1742 = vadd.f32 %v1680, %v351
        %1743 = vrot.lane.b32.xlu0 %v1631, 64
        %v1744 = vpop.permute.xlu0 %1743
        %1745 = vrot.lane.b32.xlu0 %v1632, 64
        %v1746 = vpop.permute.xlu0 %1745
        %v1749 = vsel %vm468, %v1744, 0.0
        %1750 = vadd.xlane.f32.xlu0 %v1749
        %v1751 = vpop.xlane.xlu0 %1750
        %v1752 = vsel %vm468, %v1746, 0.0
        %1753 = vadd.xlane.f32.xlu0 %v1752
        %v1754 = vpop.xlane.xlu0 %1753
        %1755 = vrot.lane.b32.xlu0 %v1615, 32
        %v1756 = vpop.permute.xlu0 %1755
        %1757 = vrot.lane.b32.xlu0 %v1616, 32
        %v1758 = vpop.permute.xlu0 %1757
        %v1761 = vsel %vm468, %v1756, 0.0
        %1762 = vadd.xlane.f32.xlu0 %v1761
        %v1763 = vpop.xlane.xlu0 %1762
        %v1764 = vsel %vm468, %v1758, 0.0
        %1765 = vadd.xlane.f32.xlu0 %v1764
        %v1766 = vpop.xlane.xlu0 %1765
        %v1767 = vadd.f32 %v1751, %v1763
        %v1768 = vadd.f32 %v1754, %v1766
        %v1769 = vadd.f32 %v1767, %v356
        %v1770 = vadd.f32 %v1768, %v357
        %v1771 = vmul.f32 %v1769, 100.0
        %v1772 = vmul.f32 %v1770, 100.0
        %v1773 = vxor.u32 %v1771, 2147483648
        %v1774 = vxor.u32 %v1772, 2147483648
        %v1775 = vmul.f32 %v1773, 1.442695
        %v1776 = vpow.pop %v1775
        %v1777 = vmul.f32 %v1774, 1.442695
        %v1778 = vpow.pop %v1777
        %v1779 = vadd.f32 %v1776, 1.0
        %v1780 = vadd.f32 %v1778, 1.0
        %v1781 = vrcp.pop %v1779
        %v1782 = vmul.f32 1.0, %v1781
        %v1783 = vrcp.pop %v1780
        %v1784 = vmul.f32 1.0, %v1783
        %1786 = vset.pattern.permute.xlu0 3
        %1787 = vperm.xlu0 %1786, %v1782
        %v1788 = vpop.permute.xlu0 %1787
        %1791 = vset.pattern.permute.xlu0 3
        %1792 = vperm.xlu0 %1791, %v1784
        %v1793 = vpop.permute.xlu0 %1792
        %v1795 = vmul.f32 %v1788, %v352
        %v1796 = vmul.f32 %v1793, %v353
        %v1797 = vadd.f32 %v1739, %v1795
        %v1798 = vadd.f32 %v1740, %v1796
        %v1799 = vadd.f32 %v1741, %v352
        %v1800 = vadd.f32 %v1742, %v353
        %1801 = vrot.lane.b32.xlu0 %v1565, 64
        %v1802 = vpop.permute.xlu0 %1801
        %1803 = vrot.lane.b32.xlu0 %v1566, 64
        %v1804 = vpop.permute.xlu0 %1803
        %v1807 = vsel %vm468, %v1802, 0.0
        %1808 = vadd.xlane.f32.xlu0 %v1807
        %v1809 = vpop.xlane.xlu0 %1808
        %v1810 = vsel %vm468, %v1804, 0.0
        %1811 = vadd.xlane.f32.xlu0 %v1810
        %v1812 = vpop.xlane.xlu0 %1811
        %1813 = vrot.lane.b32.xlu0 %v1549, 32
        %v1814 = vpop.permute.xlu0 %1813
        %1815 = vrot.lane.b32.xlu0 %v1550, 32
        %v1816 = vpop.permute.xlu0 %1815
        %v1819 = vsel %vm468, %v1814, 0.0
        %1820 = vadd.xlane.f32.xlu0 %v1819
        %v1821 = vpop.xlane.xlu0 %1820
        %v1822 = vsel %vm468, %v1816, 0.0
        %1823 = vadd.xlane.f32.xlu0 %v1822
        %v1824 = vpop.xlane.xlu0 %1823
        %v1825 = vadd.f32 %v1809, %v1821
        %v1826 = vadd.f32 %v1812, %v1824
        %v1827 = vadd.f32 %v1825, %v356
        %v1828 = vadd.f32 %v1826, %v357
        %v1829 = vmul.f32 %v1827, 100.0
        %v1830 = vmul.f32 %v1828, 100.0
        %v1831 = vxor.u32 %v1829, 2147483648
        %v1832 = vxor.u32 %v1830, 2147483648
        %v1833 = vmul.f32 %v1831, 1.442695
        %v1834 = vpow.pop %v1833
        %v1835 = vmul.f32 %v1832, 1.442695
        %v1836 = vpow.pop %v1835
        %v1837 = vadd.f32 %v1834, 1.0
        %v1838 = vadd.f32 %v1836, 1.0
        %v1839 = vrcp.pop %v1837
        %v1840 = vmul.f32 1.0, %v1839
        %v1841 = vrcp.pop %v1838
        %v1842 = vmul.f32 1.0, %v1841
        %1844 = vset.pattern.permute.xlu0 4
        %1845 = vperm.xlu0 %1844, %v1840
        %v1846 = vpop.permute.xlu0 %1845
        %1849 = vset.pattern.permute.xlu0 4
        %1850 = vperm.xlu0 %1849, %v1842
        %v1851 = vpop.permute.xlu0 %1850
        %v1853 = vmul.f32 %v1846, %v354
        %v1854 = vmul.f32 %v1851, %v355
        %v1855 = vadd.f32 %v1797, %v1853
        %v1856 = vadd.f32 %v1798, %v1854
        %v1857 = vadd.f32 %v1799, %v354
        %v1858 = vadd.f32 %v1800, %v355
        %v1859 = vmax.f32 %v696, 0.0
        %v1860 = vmax.f32 %v701, 0.0
        %1863 = vrot.lane.b32.xlu0 %v696, 96
        %v1864 = vpop.permute.xlu0 %1863
        %1865 = vrot.lane.b32.xlu0 %v701, 96
        %v1866 = vpop.permute.xlu0 %1865
        %v1867 = vsel %vm468, %v696, 0
        %v1869 = vsel %vm468, %v701, 0
        %v1871 = vsel %vm468, %v1864, 0
        %v1873 = vsel %vm468, %v1866, 0
        %1875 = vmatprep.subr.mxu0 0.0
        %1876 = vmatpush1.xpose.msra.mxu0 %v1871
        %1877 = vmatprep.subr.mxu0 0.0
        %1878 = vmatpush1.xpose.msra.mxu0 %v1873
        %1879 = vmatprep.subr.mxu0 0.0
        %1880 = vmatpush1.xpose.msra.mxu0 0.0
        %1881 = vmatprep.subr.mxu0 0.0
        %1882 = vmatpush1.xpose.msra.mxu0 0.0
        %1883 = vmatprep.subr.mxu0 0.0
        %1884 = vmatpush1.xpose.msra.mxu0 0.0
        %1885 = vmatprep.subr.mxu0 0.0
        %1886 = vmatpush1.xpose.msra.mxu0 0.0
        %1887 = vmatprep.subr.mxu0 0.0
        %1888 = vmatpush1.xpose.msra.mxu0 0.0
        %1889 = vmatprep.subr.mxu0 0.0
        %1890 = vmatpush1.xpose.msra.mxu0 0.0
        %1891 = vmatprep.subr.mxu0 0.0
        %1892 = vmatpush1.xpose.msra.mxu0 0.0
        %1893 = vmatprep.subr.mxu0 0.0
        %1894 = vmatpush1.xpose.msra.mxu0 0.0
        %1895 = vmatprep.subr.mxu0 0.0
        %1896 = vmatpush1.xpose.msra.mxu0 0.0
        %1897 = vmatprep.subr.mxu0 0.0
        %1898 = vmatpush1.xpose.msra.mxu0 0.0
        %1899 = vmatprep.subr.mxu0 0.0
        %1900 = vmatpush1.xpose.msra.mxu0 0.0
        %1901 = vmatprep.subr.mxu0 0.0
        %1902 = vmatpush1.xpose.msra.mxu0 0.0
        %1903 = vmatprep.subr.mxu0 0.0
        %1904 = vmatpush1.xpose.msra.mxu0 0.0
        %1905 = vmatprep.subr.mxu0 0.0
        %1906 = vmatpush1.xpose.msra.mxu0 0.0
        %1907 = vmatprep.subr.mxu0 0.0
        %1908 = vmatpush1.xpose.msra.mxu0 0.0
        %1909 = vmatprep.subr.mxu0 0.0
        %1910 = vmatpush1.xpose.msra.mxu0 0.0
        %1911 = vmatprep.subr.mxu0 0.0
        %1912 = vmatpush1.xpose.msra.mxu0 0.0
        %1913 = vmatprep.subr.mxu0 0.0
        %1914 = vmatpush1.xpose.msra.mxu0 0.0
        %1915 = vmatprep.subr.mxu0 0.0
        %1916 = vmatpush1.xpose.msra.mxu0 0.0
        %1917 = vmatprep.subr.mxu0 0.0
        %1918 = vmatpush1.xpose.msra.mxu0 0.0
        %1919 = vmatprep.subr.mxu0 0.0
        %1920 = vmatpush1.xpose.msra.mxu0 0.0
        %1921 = vmatprep.subr.mxu0 0.0
        %1922 = vmatpush1.xpose.msra.mxu0 0.0
        %1923 = vmatprep.subr.mxu0 0.0
        %1924 = vmatpush1.xpose.msra.mxu0 0.0
        %1925 = vmatprep.subr.mxu0 0.0
        %1926 = vmatpush1.xpose.msra.mxu0 0.0
        %1927 = vmatprep.subr.mxu0 0.0
        %1928 = vmatpush1.xpose.msra.mxu0 0.0
        %1929 = vmatprep.subr.mxu0 0.0
        %1930 = vmatpush1.xpose.msra.mxu0 0.0
        %1931 = vmatprep.subr.mxu0 0.0
        %1932 = vmatpush1.xpose.msra.mxu0 0.0
        %1933 = vmatprep.subr.mxu0 0.0
        %1934 = vmatpush1.xpose.msra.mxu0 0.0
        %1935 = vmatprep.subr.mxu0 0.0
        %1936 = vmatpush1.xpose.msra.mxu0 0.0
        %1937 = vmatprep.subr.mxu0 0.0
        %1938 = vmatpush1.xpose.msra.mxu0 0.0
        %1939 = vmatprep.mubr.f32.mxu0 0.0
        %1940 = vmatmul.mubr.f32.gmra.mrb[0].mxu0 %v1867
        %v1941 = vpop.f32.mrb[0].mxu0
        %v1942 = vadd.f32 0.0, %v1941
        %v1943 = vpop.f32.mrb[0].mxu0
        %1944 = vmatprep.mubr.f32.mxu0 0.0
        %1945 = vmatmul.mubr.f32.gmra.mrb[0].mxu0 %v1869
        %v1946 = vpop.f32.mrb[0].mxu0
        %v1947 = vadd.f32 0.0, %v1946
        %v1948 = vpop.f32.mrb[0].mxu0
        %1949 = vdwg.mxu0
        %v1950 = vmul.f32 %v1942, 0.17677669
        %v1951 = vmul.f32 %v1947, 0.17677669
        %v1952 = vsub.f32 %v1857, 1.0
        %v1953 = vsub.f32 %v1858, 1.0
        %v1954 = vmul.f32 %v1952, 1e+30
        %v1955 = vmul.f32 %v1953, 1e+30
        %v1956 = vadd.f32 %v1950, %v1954
        %v1957 = vadd.f32 %v1951, %v1955
        %v1958 = vsel %vm364, %v1956, -inf
        %1959 = vmax.xlane.f32.xlu0 %v1958
        %v1960 = vpop.xlane.xlu0 %1959
        %v1961 = vsel %vm364, %v1957, -inf
        %1962 = vmax.xlane.f32.xlu0 %v1961
        %v1963 = vpop.xlane.xlu0 %1962
        %v1964 = vsub.f32 %v1956, %v1960
        %v1965 = vsub.f32 %v1957, %v1963
        %v1966 = vmul.f32 %v1964, 1.442695
        %v1967 = vpow.pop %v1966
        %v1968 = vmul.f32 %v1965, 1.442695
        %v1969 = vpow.pop %v1968
        %v1970 = vsel %vm364, %v1967, 0.0
        %1971 = vadd.xlane.f32.xlu0 %v1970
        %v1972 = vpop.xlane.xlu0 %1971
        %v1973 = vsel %vm364, %v1969, 0.0
        %1974 = vadd.xlane.f32.xlu0 %v1973
        %v1975 = vpop.xlane.xlu0 %1974
        %v1976 = vrcp.pop %v1972
        %v1977 = vrcp.pop %v1975
        %v1978 = vmul.f32 %v1967, %v1976
        %v1979 = vmul.f32 %v1969, %v1977
        %v1980 = vmul.f32 %v1978, %v1855
        %v1981 = vmul.f32 %v1979, %v1856
        %1984 = vrot.lane.b32.xlu0 %v1859, 64
        %v1985 = vpop.permute.xlu0 %1984
        %1986 = vrot.lane.b32.xlu0 %v1860, 64
        %v1987 = vpop.permute.xlu0 %1986
        %v1991 = vsel %vm364, %v1980, 0
        %v1994 = vsel %vm364, %v1981, 0
        %1996 = vmatprep.subr.mxu0 0.0
        %1997 = vmatpush1.msra.mxu0 %v1985
        %1998 = vmatprep.subr.mxu0 0.0
        %1999 = vmatpush1.msra.mxu0 %v1987
        %2000 = vmatprep.subr.mxu0 0.0
        %2001 = vmatpush1.msra.mxu0 0.0
        %2002 = vmatprep.subr.mxu0 0.0
        %2003 = vmatpush1.msra.mxu0 0.0
        %2004 = vmatprep.subr.mxu0 0.0
        %2005 = vmatpush1.msra.mxu0 0.0
        %2006 = vmatprep.subr.mxu0 0.0
        %2007 = vmatpush1.msra.mxu0 0.0
        %2008 = vmatprep.subr.mxu0 0.0
        %2009 = vmatpush1.msra.mxu0 0.0
        %2010 = vmatprep.subr.mxu0 0.0
        %2011 = vmatpush1.msra.mxu0 0.0
        %2012 = vmatprep.subr.mxu0 0.0
        %2013 = vmatpush1.msra.mxu0 0.0
        %2014 = vmatprep.subr.mxu0 0.0
        %2015 = vmatpush1.msra.mxu0 0.0
        %2016 = vmatprep.subr.mxu0 0.0
        %2017 = vmatpush1.msra.mxu0 0.0
        %2018 = vmatprep.subr.mxu0 0.0
        %2019 = vmatpush1.msra.mxu0 0.0
        %2020 = vmatprep.subr.mxu0 0.0
        %2021 = vmatpush1.msra.mxu0 0.0
        %2022 = vmatprep.subr.mxu0 0.0
        %2023 = vmatpush1.msra.mxu0 0.0
        %2024 = vmatprep.subr.mxu0 0.0
        %2025 = vmatpush1.msra.mxu0 0.0
        %2026 = vmatprep.subr.mxu0 0.0
        %2027 = vmatpush1.msra.mxu0 0.0
        %2028 = vmatprep.subr.mxu0 0.0
        %2029 = vmatpush1.msra.mxu0 0.0
        %2030 = vmatprep.subr.mxu0 0.0
        %2031 = vmatpush1.msra.mxu0 0.0
        %2032 = vmatprep.subr.mxu0 0.0
        %2033 = vmatpush1.msra.mxu0 0.0
        %2034 = vmatprep.subr.mxu0 0.0
        %2035 = vmatpush1.msra.mxu0 0.0
        %2036 = vmatprep.subr.mxu0 0.0
        %2037 = vmatpush1.msra.mxu0 0.0
        %2038 = vmatprep.subr.mxu0 0.0
        %2039 = vmatpush1.msra.mxu0 0.0
        %2040 = vmatprep.subr.mxu0 0.0
        %2041 = vmatpush1.msra.mxu0 0.0
        %2042 = vmatprep.subr.mxu0 0.0
        %2043 = vmatpush1.msra.mxu0 0.0
        %2044 = vmatprep.subr.mxu0 0.0
        %2045 = vmatpush1.msra.mxu0 0.0
        %2046 = vmatprep.subr.mxu0 0.0
        %2047 = vmatpush1.msra.mxu0 0.0
        %2048 = vmatprep.subr.mxu0 0.0
        %2049 = vmatpush1.msra.mxu0 0.0
        %2050 = vmatprep.subr.mxu0 0.0
        %2051 = vmatpush1.msra.mxu0 0.0
        %2052 = vmatprep.subr.mxu0 0.0
        %2053 = vmatpush1.msra.mxu0 0.0
        %2054 = vmatprep.subr.mxu0 0.0
        %2055 = vmatpush1.msra.mxu0 0.0
        %2056 = vmatprep.subr.mxu0 0.0
        %2057 = vmatpush1.msra.mxu0 0.0
        %2058 = vmatprep.subr.mxu0 0.0
        %2059 = vmatpush1.msra.mxu0 0.0
        %2060 = vmatprep.mubr.f32.mxu0 0.0
        %2061 = vmatmul.mubr.f32.gmra.mrb[0].mxu0 %v1991
        %v2062 = vpop.f32.mrb[0].mxu0
        %v2063 = vadd.f32 0.0, %v2062
        %v2064 = vpop.f32.mrb[0].mxu0
        %2065 = vmatprep.mubr.f32.mxu0 0.0
        %2066 = vmatmul.mubr.f32.gmra.mrb[0].mxu0 %v1994
        %v2067 = vpop.f32.mrb[0].mxu0
        %v2068 = vadd.f32 0.0, %v2067
        %v2069 = vpop.f32.mrb[0].mxu0
        %2070 = vdwg.mxu0
        %v2071 = vld [vmem:[%s273] sm:$0xff]
        %v2072 = vld [vmem:[%s273 + $0x8] sm:$0xff]
        %2075 = vrot.lane.b32.xlu0 %v2071, 32
        %v2076 = vpop.permute.xlu0 %2075
        %2077 = vrot.lane.b32.xlu0 %v2072, 32
        %v2078 = vpop.permute.xlu0 %2077
        %v2081 = vsel %vm468, %v2063, %v2076
        %v2082 = vsel %vm468, %v2068, %v2078
        %v2083 = vlaneseq
        %v2084 = vshrl.u32 %v2083, 7
        %v2085 = vsub.s32 4, %v2084
        %v2086 = vrot.slane %v341, %v2085
        %v2087 = vlaneseq
        %v2088 = vshrl.u32 %v2087, 7
        %v2089 = vsub.s32 4, %v2088
        %v2090 = vrot.slane %v342, %v2089
        %v2092 = vsel %vm904, %v2081, 0
        %v2095 = vsel %vm904, %v2082, 0
        %2097 = vmatprep.subr.mxu0 %v326
        %2098 = vmatpush1.msra.mxu0 %v325
        %2099 = vmatprep.subr.mxu0 %v328
        %2100 = vmatpush1.msra.mxu0 %v327
        %2101 = vmatprep.subr.mxu0 %v330
        %2102 = vmatpush1.msra.mxu0 %v329
        %2103 = vmatprep.subr.mxu0 %v332
        %2104 = vmatpush1.msra.mxu0 %v331
        %2105 = vmatprep.subr.mxu0 %v334
        %2106 = vmatpush1.msra.mxu0 %v333
        %2107 = vmatprep.subr.mxu0 %v336
        %2108 = vmatpush1.msra.mxu0 %v335
        %2109 = vmatprep.subr.mxu0 %v338
        %2110 = vmatpush1.msra.mxu0 %v337
        %2111 = vmatprep.subr.mxu0 %v340
        %2112 = vmatpush1.msra.mxu0 %v339
        %2113 = vmatprep.subr.mxu0 0.0
        %2114 = vmatpush1.msra.mxu0 0.0
        %2115 = vmatprep.subr.mxu0 0.0
        %2116 = vmatpush1.msra.mxu0 0.0
        %2117 = vmatprep.subr.mxu0 0.0
        %2118 = vmatpush1.msra.mxu0 0.0
        %2119 = vmatprep.subr.mxu0 0.0
        %2120 = vmatpush1.msra.mxu0 0.0
        %2121 = vmatprep.subr.mxu0 0.0
        %2122 = vmatpush1.msra.mxu0 0.0
        %2123 = vmatprep.subr.mxu0 0.0
        %2124 = vmatpush1.msra.mxu0 0.0
        %2125 = vmatprep.subr.mxu0 0.0
        %2126 = vmatpush1.msra.mxu0 0.0
        %2127 = vmatprep.subr.mxu0 0.0
        %2128 = vmatpush1.msra.mxu0 0.0
        %2129 = vmatprep.subr.mxu0 0.0
        %2130 = vmatpush1.msra.mxu0 0.0
        %2131 = vmatprep.subr.mxu0 0.0
        %2132 = vmatpush1.msra.mxu0 0.0
        %2133 = vmatprep.subr.mxu0 0.0
        %2134 = vmatpush1.msra.mxu0 0.0
        %2135 = vmatprep.subr.mxu0 0.0
        %2136 = vmatpush1.msra.mxu0 0.0
        %2137 = vmatprep.subr.mxu0 0.0
        %2138 = vmatpush1.msra.mxu0 0.0
        %2139 = vmatprep.subr.mxu0 0.0
        %2140 = vmatpush1.msra.mxu0 0.0
        %2141 = vmatprep.subr.mxu0 0.0
        %2142 = vmatpush1.msra.mxu0 0.0
        %2143 = vmatprep.subr.mxu0 0.0
        %2144 = vmatpush1.msra.mxu0 0.0
        %2145 = vmatprep.subr.mxu0 0.0
        %2146 = vmatpush1.msra.mxu0 0.0
        %2147 = vmatprep.subr.mxu0 0.0
        %2148 = vmatpush1.msra.mxu0 0.0
        %2149 = vmatprep.subr.mxu0 0.0
        %2150 = vmatpush1.msra.mxu0 0.0
        %2151 = vmatprep.subr.mxu0 0.0
        %2152 = vmatpush1.msra.mxu0 0.0
        %2153 = vmatprep.subr.mxu0 0.0
        %2154 = vmatpush1.msra.mxu0 0.0
        %2155 = vmatprep.subr.mxu0 0.0
        %2156 = vmatpush1.msra.mxu0 0.0
        %2157 = vmatprep.subr.mxu0 0.0
        %2158 = vmatpush1.msra.mxu0 0.0
        %2159 = vmatprep.subr.mxu0 0.0
        %2160 = vmatpush1.msra.mxu0 0.0
        %2161 = vmatprep.mubr.f32.mxu0 0.0
        %2162 = vmatmul.mubr.f32.gmra.mrb[0].mxu0 %v2092
        %v2163 = vpop.f32.mrb[0].mxu0
        %v2164 = vadd.f32 %v2086, %v2163
        %v2165 = vpop.f32.mrb[0].mxu0
        %v2166 = vadd.f32 %v2090, %v2165
        %2167 = vmatprep.mubr.f32.mxu0 0.0
        %2168 = vmatmul.mubr.f32.gmra.mrb[0].mxu0 %v2095
        %v2169 = vpop.f32.mrb[0].mxu0
        %v2170 = vadd.f32 %v2086, %v2169
        %v2171 = vpop.f32.mrb[0].mxu0
        %v2172 = vadd.f32 %v2090, %v2171
        %2173 = vdwg.mxu0
        %v2174 = vadd.f32 %v2164, %v2166
        %v2175 = vadd.f32 %v2170, %v2172
        %v2176 = vxor.u32 %v2174, 2147483648
        %v2177 = vxor.u32 %v2175, 2147483648
        %v2178 = vmul.f32 %v2176, 1.442695
        %v2179 = vpow.pop %v2178
        %v2180 = vmul.f32 %v2177, 1.442695
        %v2181 = vpow.pop %v2180
        %v2182 = vadd.f32 %v2179, 1.0
        %v2183 = vadd.f32 %v2181, 1.0
        %v2184 = vrcp.pop %v2182
        %v2185 = vmul.f32 1.0, %v2184
        %v2186 = vrcp.pop %v2183
        %v2187 = vmul.f32 1.0, %v2186
        %2190 = vrot.lane.b32.xlu0 %v2166, 64
        %v2191 = vpop.permute.xlu0 %2190
        %2192 = vrot.lane.b32.xlu0 %v2172, 64
        %v2193 = vpop.permute.xlu0 %2192
        %v2196 = vmul.f32 %v2185, %v2191
        %v2197 = vmul.f32 %v2187, %v2193
        %2200 = vrot.lane.b32.xlu0 %v2196, 64
        %v2201 = vpop.permute.xlu0 %2200
        %2202 = vrot.lane.b32.xlu0 %v2197, 64
        %v2203 = vpop.permute.xlu0 %2202
        %v2206 = vadd.f32 %v2164, %v2201
        %v2207 = vadd.f32 %v2170, %v2203
        %v2208 = vtanh.pop %v2206
        %v2209 = vtanh.pop %v2207
        %v2210 = vsub.f32 1.0, %v2185
        %v2211 = vsub.f32 1.0, %v2187
        %2214 = vrot.lane.b32.xlu0 %v2208, 96
        %v2215 = vpop.permute.xlu0 %2214
        %2216 = vrot.lane.b32.xlu0 %v2209, 96
        %v2217 = vpop.permute.xlu0 %2216
        %v2220 = vmul.f32 %v2210, %v2215
        %v2221 = vmul.f32 %v2211, %v2217
        %v2222 = vmul.f32 %v2185, %v2076
        %v2223 = vmul.f32 %v2187, %v2078
        %v2224 = vadd.f32 %v2220, %v2222
        %v2225 = vadd.f32 %v2221, %v2223
        %2228 = vrot.lane.b32.xlu0 %v2224, 96
        %v2229 = vpop.permute.xlu0 %2228
        %2230 = vrot.lane.b32.xlu0 %v2225, 96
        %v2231 = vpop.permute.xlu0 %2230
        %2234 = vst.msk [vmem:[%s285] sm:$0xff] %vm468, %v2229
        %2235 = vst.msk [vmem:[%s285 + $0x8] sm:$0xff] %vm468, %v2231
        %s2236 = smul.u32 2, %s17
        %p2237 = scmp.lt.s32.totalorder %s2236, 3
        %s2238 = scalar_select %p2237, %s2236, 3
        %s2239 = smul.addr %s2238, 8
        %s2240 = scalar_lea.vmem %s5, %s2239
        // Predicated region
        $region45: #{gat_net_forward.1} parent=39 // pred_check
          %p2241 = pneg %p155
        $region46: #{gat_net_forward.1} parent=39 // pred_check_branch
          %2243 = sbr.rel (%p2241) target = $region48
        $region47: #{gat_net_forward.1} parent=39 // pred_region
          %s2244 = smul.u32 2, %s17
        $region48: #{gat_net_forward.1} parent=39 // pred_fallthru
          _
      $region40: #{gat_net_forward.1} parent=5 // pred_fallthru
        _
      %p2245 = scmp.le.s32.totalorder 2, %s12
      // Predicated region
      $region49: #{gat_net_forward.1} parent=5 // pred_check
        %p2246 = pneg %p2245
      $region50: #{gat_net_forward.1} parent=5 // pred_check_branch
        %2248 = sbr.rel (%p2246) target = $region52
      $region51: #{gat_net_forward.1} parent=5 // pred_region
        %s2249 = ssub.s32 %s12, 2
        // Predicated region
        $region53: #{gat_net_forward.1} parent=51 // pred_check
          %p2250 = pneg %p161
        $region54: #{gat_net_forward.1} parent=51 // pred_check_branch
          %2252 = sbr.rel (%p2250) target = $region56
        $region55: #{gat_net_forward.1} parent=51 // pred_region
          %s2253 = smul.u32 2, %s18
          %p2254 = scmp.lt.s32.totalorder %s2253, 3
          %s2255 = scalar_select %p2254, %s2253, 3
          %s2256 = smul.addr %s2255, 8
          %s2257 = scalar_lea.vmem %s5, %s2256
        $region56: #{gat_net_forward.1} parent=51 // pred_fallthru
          _
      $region52: #{gat_net_forward.1} parent=5 // pred_fallthru
        _
    $region6: #{gat_net_forward.1} parent=1 // loop_footer
      %s16 = sadd.s32 1, %s12
    $region7: #{gat_net_forward.1} parent=1 // loop_footer_branch
      %11 = sbr.rel target = $region3
    $region8: #{gat_net_forward.1} parent=1 // loop_exit
      _
    %2258 = vsyncpa [#allocation3], 1
    %s2259 = scalar_lea.sflag [#allocation3], 1
    %2260 = vsyncpa %s2259, 1

</llo_original>
